<compile_context>
chip_gen: v7x
topology: tpu7x:2x2x1
jax: 0.10.0
libtpu: 0.0.40
codegen_flags: <defaults>
</compile_context>

<pallas_src>
import functools
import math

import jax
import jax.numpy as jnp
from jax.experimental import pallas as pl
from jax.experimental.pallas import tpu as pltpu  # noqa: F401  (TPU backend)


CFG = dict(vocab=100, hidden=32, layers=2, heads=2, head_dim=16,
           intermediate=64, max_pos=64, type_vocab=2, seq=8, batch=2)


# ------------------------------ kernel helpers ------------------------------

def _layernorm(x, g, b, eps):
    mu = jnp.mean(x, axis=-1, keepdims=True)
    d = x - mu
    var = jnp.mean(d * d, axis=-1, keepdims=True)
    return d * jax.lax.rsqrt(var + eps) * g + b


def _bf16_dot(a, b):
    return jnp.dot(a.astype(jnp.bfloat16), b.astype(jnp.bfloat16),
                   preferred_element_type=jnp.float32)


# ------------------------------- fused kernel -------------------------------

def _bert_fused_kernel(
    x_emb_ref, mask_ref, emb_ln_ref,
    qkv_w_ref, qkv_b_ref, o_w_ref,
    fc1_w_ref, fc1_b_ref, fc2_w_ref, vec_h_ref,
    pool_w_ref, pool_b_ref, cls_w_ref, cls_b_ref,
    logits_ref,
    *, batch, seq, heads, head_dim, num_layers, eps):
    B, S, D = batch, seq, head_dim
    H = heads * head_dim
    scale = 1.0 / math.sqrt(D)

    # Embedding LayerNorm seeds the hidden state (kept in vregs, never HBM).
    emb_ln = emb_ln_ref[...]                                 # (2, H)
    x = _layernorm(x_emb_ref[...], emb_ln[0:1, :], emb_ln[1:2, :], eps)

    mask3 = mask_ref[...]                                    # (B, 1, S) additive

    # ---- encoder layers: static unroll over the resident weight stacks -----
    for l in range(num_layers):
        # fused Q/K/V projection (one matmul)
        qkv = _bf16_dot(x, qkv_w_ref[l]) + qkv_b_ref[l]      # (B*S, 3H) f32
        q3 = qkv[:, 0 * H:1 * H].reshape(B, S, H)
        k3 = qkv[:, 1 * H:2 * H].reshape(B, S, H)
        v3 = qkv[:, 2 * H:3 * H].reshape(B, S, H)

        # self-attention: batched over B; short static loop over heads
        ctx_heads = []
        for h in range(heads):
            cs = h * D
            qh = q3[:, :, cs:cs + D].astype(jnp.bfloat16)    # (B, S, D)
            kh = k3[:, :, cs:cs + D].astype(jnp.bfloat16)
            vh = v3[:, :, cs:cs + D].astype(jnp.bfloat16)
            s = jnp.einsum('bqd,bkd->bqk', qh, kh,
                           preferred_element_type=jnp.float32)  # (B, S, S)
            s = s * scale + mask3
            s = s - jnp.max(s, axis=-1, keepdims=True)
            p = jnp.exp(s)
            p = p * pl.reciprocal(jnp.sum(p, axis=-1, keepdims=True),
                                  approx=True)
            ctx_heads.append(
                jnp.einsum('bqk,bkd->bqd', p.astype(jnp.bfloat16), vh,
                           preferred_element_type=jnp.float32))
        # context stays in vregs -> straight into the output projection
        ctx = jnp.concatenate(ctx_heads, axis=-1).reshape(B * S, H)

        vec = vec_h_ref[l]                                   # (6, H) small params
        o_b, ln1_g, ln1_b = vec[0:1, :], vec[1:2, :], vec[2:3, :]
        fc2_b, ln2_g, ln2_b = vec[3:4, :], vec[4:5, :], vec[5:6, :]

        # attention output projection + residual + LayerNorm 1
        attn = _bf16_dot(ctx, o_w_ref[l]) + o_b
        x = _layernorm(x + attn, ln1_g, ln1_b, eps)

        # feed-forward (GELU) + residual + LayerNorm 2
        h1 = _bf16_dot(x, fc1_w_ref[l]) + fc1_b_ref[l]
        # TODO(synk): HF BERT uses exact erf-GELU; tanh approximation used here.
        c = math.sqrt(2.0 / math.pi)
        h1 = 0.5 * h1 * (1.0 + jnp.tanh(c * (h1 + 0.044715 * h1 * h1 * h1)))
        ffn = _bf16_dot(h1, fc2_w_ref[l]) + fc2_b
        x = _layernorm(x + ffn, ln2_g, ln2_b, eps)

    # ---- pooler (tanh over all [CLS] rows) + classifier; one logits store ---
    cls_tok = x.reshape(B, S, H)[:, 0:1, :].reshape(B, H)    # (B, H)
    pooled = jnp.tanh(_bf16_dot(cls_tok, pool_w_ref[...]) + pool_b_ref[...])
    # nn.Dropout(0.1) is identity at inference time.
    logits_ref[...] = _bf16_dot(pooled, cls_w_ref[...]) + cls_b_ref[...]


# ------------------------------ host-side glue -------------------------------

def bert_classifier_forward(packed, input_ids, attention_mask, cfg):
    B, S = input_ids.shape
    H, nh, hd = cfg["hidden"], cfg["heads"], cfg["head_dim"]
    L = cfg["layers"]

    # embeddings (gather is glue; LayerNorm happens inside the fused kernel)
    word = jnp.take(packed["word_emb"], input_ids, axis=0)       # (B, S, H)
    pos = packed["pos_emb"][:S][None, :, :]                      # (1, S, H)
    tok = packed["type_emb"][0][None, None, :]                   # token_type_ids default to 0 (HF)
    x_emb = (word + pos + tok).reshape(B * S, H).astype(jnp.float32)

    # additive mask, pre-shaped (B, 1, S) so the kernel broadcasts it directly
    ext = ((1.0 - attention_mask.astype(jnp.float32)) * -10000.0)[:, None, :]

    kernel = functools.partial(_bert_fused_kernel, batch=B, seq=S,
                               heads=nh, head_dim=hd, num_layers=L, eps=1e-12)

    # No grid: activations + all L layers of weights fit in VMEM at these
    # shapes, so every operand is a single full-array VMEM block and the only
    # HBM store is the final logits.
    return pl.pallas_call(
        kernel,
        out_shape=jax.ShapeDtypeStruct((B, 1), jnp.float32),
    )(x_emb, ext, packed["emb_ln"],
      packed["qkv_w"], packed["qkv_b"], packed["o_w"],
      packed["fc1_w"], packed["fc1_b"], packed["fc2_w"], packed["vec_h"],
      packed["pool_w"], packed["pool_b"], packed["cls_w"], packed["cls_b"])


# ---------------------------- params & packing -------------------------------

def init_params(key, cfg):
    H, I = cfg["hidden"], cfg["intermediate"]
    keys = iter(jax.random.split(key, 128))

    def w(shape):
        return (0.02 * jax.random.normal(next(keys), shape)).astype(jnp.float32)

    zeros = lambda n: jnp.zeros((1, n), jnp.float32)
    ones = lambda n: jnp.ones((1, n), jnp.float32)

    params = {
        "word_emb": w((cfg["vocab"], H)),
        "pos_emb": w((cfg["max_pos"], H)),
        "type_emb": w((cfg["type_vocab"], H)),
        "emb_ln_g": ones(H), "emb_ln_b": zeros(H),
        "layers": [],
        "pool_w": w((H, H)), "pool_b": zeros(H),
        "cls_w": w((H, 1)), "cls_b": zeros(1),
    }
    for _ in range(cfg["layers"]):
        params["layers"].append({
            "q_w": w((H, H)), "q_b": zeros(H),
            "k_w": w((H, H)), "k_b": zeros(H),
            "v_w": w((H, H)), "v_b": zeros(H),
            "o_w": w((H, H)), "o_b": zeros(H),
            "ln1_g": ones(H), "ln1_b": zeros(H),
            "fc1_w": w((H, I)), "fc1_b": zeros(I),
            "fc2_w": w((I, H)), "fc2_b": zeros(H),
            "ln2_g": ones(H), "ln2_b": zeros(H),
        })
    return params


def pack_params(params):
    """One-time prep: concat Q/K/V, stack per-layer params on a leading L axis,
    pack the small width-H per-layer vectors into one slab, and store matmul
    weights in bf16 (f32 accumulation in-kernel)."""
    layers = params["layers"]
    bf16 = jnp.bfloat16
    stack = lambda k: jnp.stack([lp[k] for lp in layers], axis=0)
    return {
        "word_emb": params["word_emb"],
        "pos_emb": params["pos_emb"],
        "type_emb": params["type_emb"],
        "emb_ln": jnp.concatenate([params["emb_ln_g"], params["emb_ln_b"]],
                                  axis=0),                             # (2, H)
        "qkv_w": jnp.stack(
            [jnp.concatenate([lp["q_w"], lp["k_w"], lp["v_w"]], axis=1)
             for lp in layers], axis=0).astype(bf16),                  # (L, H, 3H)
        "qkv_b": jnp.stack(
            [jnp.concatenate([lp["q_b"], lp["k_b"], lp["v_b"]], axis=1)
             for lp in layers], axis=0),                               # (L, 1, 3H)
        "o_w": stack("o_w").astype(bf16),                              # (L, H, H)
        "fc1_w": stack("fc1_w").astype(bf16),                          # (L, H, I)
        "fc1_b": stack("fc1_b"),                                       # (L, 1, I)
        "fc2_w": stack("fc2_w").astype(bf16),                          # (L, I, H)
        "vec_h": jnp.stack(
            [jnp.concatenate([lp["o_b"], lp["ln1_g"], lp["ln1_b"],
                              lp["fc2_b"], lp["ln2_g"], lp["ln2_b"]], axis=0)
             for lp in layers], axis=0),                               # (L, 6, H)
        "pool_w": params["pool_w"].astype(bf16),
        "pool_b": params["pool_b"],
        "cls_w": params["cls_w"].astype(bf16),
        "cls_b": params["cls_b"],
    }


if __name__ == "__main__":
    cfg = CFG
    key = jax.random.PRNGKey(0)
    pkey, ikey = jax.random.split(key)

    params = init_params(pkey, cfg)
    packed = pack_params(params)

    input_ids = jax.random.randint(ikey, (cfg["batch"], cfg["seq"]),
                                   0, cfg["vocab"])
    attention_mask = jnp.ones((cfg["batch"], cfg["seq"]), jnp.float32)

    fwd = jax.jit(functools.partial(bert_classifier_forward, cfg=cfg))
    out = jax.block_until_ready(fwd(packed, input_ids, attention_mask))

    assert out.shape == (cfg["batch"], 1), out.shape
    assert bool(jnp.all(jnp.isfinite(out)))
    print("KERNEL_OK")
</pallas_src>

<mosaic_0001>
module attributes {stable_mosaic.version = 11 : i64} {
  func.func @_bert_fused_kernel(%arg0: memref<16x32xf32, #tpu.memory_space<vmem>>, %arg1: memref<2x1x8xf32, #tpu.memory_space<vmem>>, %arg2: memref<2x32xf32, #tpu.memory_space<vmem>>, %arg3: memref<2x32x96xbf16, #tpu.memory_space<vmem>>, %arg4: memref<2x1x96xf32, #tpu.memory_space<vmem>>, %arg5: memref<2x32x32xbf16, #tpu.memory_space<vmem>>, %arg6: memref<2x32x64xbf16, #tpu.memory_space<vmem>>, %arg7: memref<2x1x64xf32, #tpu.memory_space<vmem>>, %arg8: memref<2x64x32xbf16, #tpu.memory_space<vmem>>, %arg9: memref<2x6x32xf32, #tpu.memory_space<vmem>>, %arg10: memref<32x32xbf16, #tpu.memory_space<vmem>>, %arg11: memref<1x32xf32, #tpu.memory_space<vmem>>, %arg12: memref<32x1xbf16, #tpu.memory_space<vmem>>, %arg13: memref<1x1xf32, #tpu.memory_space<vmem>>, %arg14: memref<2x1xf32, #tpu.memory_space<vmem>>) attributes {dimension_semantics = [], scalar_prefetch = 0 : i64, scratch_operands = 0 : i64, tpu.core_type = #tpu.core_type<tc>} {
    %c0 = arith.constant 0 : index
    %c0_0 = arith.constant 0 : index
    %0 = vector.load %arg2[%c0, %c0_0] : memref<2x32xf32, #tpu.memory_space<vmem>>, vector<2x32xf32>
    %c0_1 = arith.constant 0 : index
    %c0_2 = arith.constant 0 : index
    %1 = vector.load %arg0[%c0_1, %c0_2] : memref<16x32xf32, #tpu.memory_space<vmem>>, vector<16x32xf32>
    %2 = vector.extract_strided_slice %0 {offsets = [0, 0], sizes = [1, 32], strides = [1, 1]} : vector<2x32xf32> to vector<1x32xf32>
    %3 = vector.extract_strided_slice %0 {offsets = [1, 0], sizes = [1, 32], strides = [1, 1]} : vector<2x32xf32> to vector<1x32xf32>
    %cst = arith.constant dense<0.000000e+00> : vector<16xf32>
    %4 = vector.multi_reduction <add>, %1, %cst [1] : vector<16x32xf32> to vector<16xf32>
    %5 = vector.shape_cast %4 : vector<16xf32> to vector<16x1xf32>
    %cst_3 = arith.constant 3.200000e+01 : f32
    %6 = vector.broadcast %cst_3 : f32 to vector<16x1xf32>
    %7 = arith.divf %5, %6 : vector<16x1xf32>
    %8 = vector.broadcast %7 : vector<16x1xf32> to vector<16x32xf32>
    %9 = arith.subf %1, %8 : vector<16x32xf32>
    %10 = arith.mulf %9, %9 : vector<16x32xf32>
    %cst_4 = arith.constant dense<0.000000e+00> : vector<16xf32>
    %11 = vector.multi_reduction <add>, %10, %cst_4 [1] : vector<16x32xf32> to vector<16xf32>
    %12 = vector.shape_cast %11 : vector<16xf32> to vector<16x1xf32>
    %cst_5 = arith.constant 3.200000e+01 : f32
    %13 = vector.broadcast %cst_5 : f32 to vector<16x1xf32>
    %14 = arith.divf %12, %13 : vector<16x1xf32>
    %cst_6 = arith.constant 9.99999996E-13 : f32
    %15 = vector.broadcast %cst_6 : f32 to vector<16x1xf32>
    %16 = arith.addf %14, %15 : vector<16x1xf32>
    %17 = math.rsqrt %16 : vector<16x1xf32>
    %18 = vector.broadcast %17 : vector<16x1xf32> to vector<16x32xf32>
    %19 = arith.mulf %9, %18 : vector<16x32xf32>
    %20 = vector.broadcast %2 : vector<1x32xf32> to vector<16x32xf32>
    %21 = arith.mulf %19, %20 : vector<16x32xf32>
    %22 = vector.broadcast %3 : vector<1x32xf32> to vector<16x32xf32>
    %23 = arith.addf %21, %22 : vector<16x32xf32>
    %c0_7 = arith.constant 0 : index
    %c0_8 = arith.constant 0 : index
    %c0_9 = arith.constant 0 : index
    %24 = vector.load %arg1[%c0_7, %c0_8, %c0_9] : memref<2x1x8xf32, #tpu.memory_space<vmem>>, vector<2x1x8xf32>
    %c0_10 = arith.constant 0 : index
    %c0_11 = arith.constant 0 : index
    %c0_12 = arith.constant 0 : index
    %25 = vector.load %arg3[%c0_10, %c0_11, %c0_12] : memref<2x32x96xbf16, #tpu.memory_space<vmem>>, vector<1x32x96xbf16>
    %26 = vector.shape_cast %25 : vector<1x32x96xbf16> to vector<32x96xbf16>
    %27 = arith.truncf %23 : vector<16x32xf32> to vector<16x32xbf16>
    %cst_13 = arith.constant dense<0.000000e+00> : vector<16x96xf32>
    %28 = tpu.matmul %27, %26, %cst_13 {dimension_numbers = #tpu.dot_dimension_numbers<[1], [0], [0], [1], [0, 0, 1, 1], [], []>} : vector<16x32xbf16>, vector<32x96xbf16>, vector<16x96xf32> -> vector<16x96xf32>
    %c0_14 = arith.constant 0 : index
    %c0_15 = arith.constant 0 : index
    %c0_16 = arith.constant 0 : index
    %29 = vector.load %arg4[%c0_14, %c0_15, %c0_16] : memref<2x1x96xf32, #tpu.memory_space<vmem>>, vector<1x1x96xf32>
    %30 = vector.shape_cast %29 : vector<1x1x96xf32> to vector<1x96xf32>
    %31 = vector.broadcast %30 : vector<1x96xf32> to vector<16x96xf32>
    %32 = arith.addf %28, %31 : vector<16x96xf32>
    %33 = vector.extract_strided_slice %32 {offsets = [0, 0], sizes = [16, 32], strides = [1, 1]} : vector<16x96xf32> to vector<16x32xf32>
    %34 = vector.shape_cast %33 : vector<16x32xf32> to vector<2x8x32xf32>
    %35 = vector.extract_strided_slice %32 {offsets = [0, 32], sizes = [16, 32], strides = [1, 1]} : vector<16x96xf32> to vector<16x32xf32>
    %36 = vector.shape_cast %35 : vector<16x32xf32> to vector<2x8x32xf32>
    %37 = vector.extract_strided_slice %32 {offsets = [0, 64], sizes = [16, 32], strides = [1, 1]} : vector<16x96xf32> to vector<16x32xf32>
    %38 = vector.shape_cast %37 : vector<16x32xf32> to vector<2x8x32xf32>
    %39 = vector.extract_strided_slice %34 {offsets = [0, 0, 0], sizes = [2, 8, 16], strides = [1, 1, 1]} : vector<2x8x32xf32> to vector<2x8x16xf32>
    %40 = arith.truncf %39 : vector<2x8x16xf32> to vector<2x8x16xbf16>
    %41 = vector.extract_strided_slice %36 {offsets = [0, 0, 0], sizes = [2, 8, 16], strides = [1, 1, 1]} : vector<2x8x32xf32> to vector<2x8x16xf32>
    %42 = arith.truncf %41 : vector<2x8x16xf32> to vector<2x8x16xbf16>
    %43 = vector.extract_strided_slice %38 {offsets = [0, 0, 0], sizes = [2, 8, 16], strides = [1, 1, 1]} : vector<2x8x32xf32> to vector<2x8x16xf32>
    %44 = arith.truncf %43 : vector<2x8x16xf32> to vector<2x8x16xbf16>
    "tpu.trace_start"() <{level = 10 : i32, message = "bqd,bkd->bqk"}> : () -> ()
    %cst_17 = arith.constant dense<0.000000e+00> : vector<2x8x8xf32>
    %45 = tpu.matmul %40, %42, %cst_17 {dimension_numbers = #tpu.dot_dimension_numbers<[2], [2], [1], [1], [0, 0, 0, 1, 1, 1], [0], [0]>} : vector<2x8x16xbf16>, vector<2x8x16xbf16>, vector<2x8x8xf32> -> vector<2x8x8xf32>
    "tpu.trace_stop"() : () -> ()
    %cst_18 = arith.constant 2.500000e-01 : f32
    %46 = vector.broadcast %cst_18 : f32 to vector<2x8x8xf32>
    %47 = arith.mulf %45, %46 : vector<2x8x8xf32>
    %48 = vector.broadcast %24 : vector<2x1x8xf32> to vector<2x8x8xf32>
    %49 = arith.addf %47, %48 : vector<2x8x8xf32>
    %cst_19 = arith.constant dense<0xFF800000> : vector<2x8xf32>
    %50 = vector.multi_reduction <maximumf>, %49, %cst_19 [2] : vector<2x8x8xf32> to vector<2x8xf32>
    %51 = vector.shape_cast %50 : vector<2x8xf32> to vector<2x8x1xf32>
    %52 = vector.broadcast %51 : vector<2x8x1xf32> to vector<2x8x8xf32>
    %53 = arith.subf %49, %52 : vector<2x8x8xf32>
    %54 = math.exp %53 : vector<2x8x8xf32>
    %cst_20 = arith.constant dense<0.000000e+00> : vector<2x8xf32>
    %55 = vector.multi_reduction <add>, %54, %cst_20 [2] : vector<2x8x8xf32> to vector<2x8xf32>
    %56 = vector.shape_cast %55 : vector<2x8xf32> to vector<2x8x1xf32>
    %57 = tpu.reciprocal %56 {approx = true} : vector<2x8x1xf32> -> vector<2x8x1xf32>
    %58 = vector.broadcast %57 : vector<2x8x1xf32> to vector<2x8x8xf32>
    %59 = arith.mulf %54, %58 : vector<2x8x8xf32>
    %60 = arith.truncf %59 : vector<2x8x8xf32> to vector<2x8x8xbf16>
    "tpu.trace_start"() <{level = 10 : i32, message = "bqk,bkd->bqd"}> : () -> ()
    %cst_21 = arith.constant dense<0.000000e+00> : vector<2x8x16xf32>
    %61 = tpu.matmul %60, %44, %cst_21 {dimension_numbers = #tpu.dot_dimension_numbers<[2], [1], [1], [2], [0, 0, 0, 1, 1, 2], [0], [0]>} : vector<2x8x8xbf16>, vector<2x8x16xbf16>, vector<2x8x16xf32> -> vector<2x8x16xf32>
    "tpu.trace_stop"() : () -> ()
    %62 = vector.extract_strided_slice %34 {offsets = [0, 0, 16], sizes = [2, 8, 16], strides = [1, 1, 1]} : vector<2x8x32xf32> to vector<2x8x16xf32>
    %63 = arith.truncf %62 : vector<2x8x16xf32> to vector<2x8x16xbf16>
    %64 = vector.extract_strided_slice %36 {offsets = [0, 0, 16], sizes = [2, 8, 16], strides = [1, 1, 1]} : vector<2x8x32xf32> to vector<2x8x16xf32>
    %65 = arith.truncf %64 : vector<2x8x16xf32> to vector<2x8x16xbf16>
    %66 = vector.extract_strided_slice %38 {offsets = [0, 0, 16], sizes = [2, 8, 16], strides = [1, 1, 1]} : vector<2x8x32xf32> to vector<2x8x16xf32>
    %67 = arith.truncf %66 : vector<2x8x16xf32> to vector<2x8x16xbf16>
    "tpu.trace_start"() <{level = 10 : i32, message = "bqd,bkd->bqk"}> : () -> ()
    %cst_22 = arith.constant dense<0.000000e+00> : vector<2x8x8xf32>
    %68 = tpu.matmul %63, %65, %cst_22 {dimension_numbers = #tpu.dot_dimension_numbers<[2], [2], [1], [1], [0, 0, 0, 1, 1, 1], [0], [0]>} : vector<2x8x16xbf16>, vector<2x8x16xbf16>, vector<2x8x8xf32> -> vector<2x8x8xf32>
    "tpu.trace_stop"() : () -> ()
    %cst_23 = arith.constant 2.500000e-01 : f32
    %69 = vector.broadcast %cst_23 : f32 to vector<2x8x8xf32>
    %70 = arith.mulf %68, %69 : vector<2x8x8xf32>
    %71 = vector.broadcast %24 : vector<2x1x8xf32> to vector<2x8x8xf32>
    %72 = arith.addf %70, %71 : vector<2x8x8xf32>
    %cst_24 = arith.constant dense<0xFF800000> : vector<2x8xf32>
    %73 = vector.multi_reduction <maximumf>, %72, %cst_24 [2] : vector<2x8x8xf32> to vector<2x8xf32>
    %74 = vector.shape_cast %73 : vector<2x8xf32> to vector<2x8x1xf32>
    %75 = vector.broadcast %74 : vector<2x8x1xf32> to vector<2x8x8xf32>
    %76 = arith.subf %72, %75 : vector<2x8x8xf32>
    %77 = math.exp %76 : vector<2x8x8xf32>
    %cst_25 = arith.constant dense<0.000000e+00> : vector<2x8xf32>
    %78 = vector.multi_reduction <add>, %77, %cst_25 [2] : vector<2x8x8xf32> to vector<2x8xf32>
    %79 = vector.shape_cast %78 : vector<2x8xf32> to vector<2x8x1xf32>
    %80 = tpu.reciprocal %79 {approx = true} : vector<2x8x1xf32> -> vector<2x8x1xf32>
    %81 = vector.broadcast %80 : vector<2x8x1xf32> to vector<2x8x8xf32>
    %82 = arith.mulf %77, %81 : vector<2x8x8xf32>
    %83 = arith.truncf %82 : vector<2x8x8xf32> to vector<2x8x8xbf16>
    "tpu.trace_start"() <{level = 10 : i32, message = "bqk,bkd->bqd"}> : () -> ()
    %cst_26 = arith.constant dense<0.000000e+00> : vector<2x8x16xf32>
    %84 = tpu.matmul %83, %67, %cst_26 {dimension_numbers = #tpu.dot_dimension_numbers<[2], [1], [1], [2], [0, 0, 0, 1, 1, 2], [0], [0]>} : vector<2x8x8xbf16>, vector<2x8x16xbf16>, vector<2x8x16xf32> -> vector<2x8x16xf32>
    "tpu.trace_stop"() : () -> ()
    %85 = tpu.concatenate %61, %84 in 2 : vector<2x8x16xf32>, vector<2x8x16xf32> -> vector<2x8x32xf32>
    %86 = vector.shape_cast %85 : vector<2x8x32xf32> to vector<16x32xf32>
    %c0_27 = arith.constant 0 : index
    %c0_28 = arith.constant 0 : index
    %c0_29 = arith.constant 0 : index
    %87 = vector.load %arg9[%c0_27, %c0_28, %c0_29] : memref<2x6x32xf32, #tpu.memory_space<vmem>>, vector<1x6x32xf32>
    %88 = vector.shape_cast %87 : vector<1x6x32xf32> to vector<6x32xf32>
    %89 = vector.extract_strided_slice %88 {offsets = [0, 0], sizes = [1, 32], strides = [1, 1]} : vector<6x32xf32> to vector<1x32xf32>
    %90 = vector.extract_strided_slice %88 {offsets = [1, 0], sizes = [1, 32], strides = [1, 1]} : vector<6x32xf32> to vector<1x32xf32>
    %91 = vector.extract_strided_slice %88 {offsets = [2, 0], sizes = [1, 32], strides = [1, 1]} : vector<6x32xf32> to vector<1x32xf32>
    %92 = vector.extract_strided_slice %88 {offsets = [3, 0], sizes = [1, 32], strides = [1, 1]} : vector<6x32xf32> to vector<1x32xf32>
    %93 = vector.extract_strided_slice %88 {offsets = [4, 0], sizes = [1, 32], strides = [1, 1]} : vector<6x32xf32> to vector<1x32xf32>
    %94 = vector.extract_strided_slice %88 {offsets = [5, 0], sizes = [1, 32], strides = [1, 1]} : vector<6x32xf32> to vector<1x32xf32>
    %c0_30 = arith.constant 0 : index
    %c0_31 = arith.constant 0 : index
    %c0_32 = arith.constant 0 : index
    %95 = vector.load %arg5[%c0_30, %c0_31, %c0_32] : memref<2x32x32xbf16, #tpu.memory_space<vmem>>, vector<1x32x32xbf16>
    %96 = vector.shape_cast %95 : vector<1x32x32xbf16> to vector<32x32xbf16>
    %97 = arith.truncf %86 : vector<16x32xf32> to vector<16x32xbf16>
    %cst_33 = arith.constant dense<0.000000e+00> : vector<16x32xf32>
    %98 = tpu.matmul %97, %96, %cst_33 {dimension_numbers = #tpu.dot_dimension_numbers<[1], [0], [0], [1], [0, 0, 1, 1], [], []>} : vector<16x32xbf16>, vector<32x32xbf16>, vector<16x32xf32> -> vector<16x32xf32>
    %99 = vector.broadcast %89 : vector<1x32xf32> to vector<16x32xf32>
    %100 = arith.addf %98, %99 : vector<16x32xf32>
    %101 = arith.addf %23, %100 : vector<16x32xf32>
    %cst_34 = arith.constant dense<0.000000e+00> : vector<16xf32>
    %102 = vector.multi_reduction <add>, %101, %cst_34 [1] : vector<16x32xf32> to vector<16xf32>
    %103 = vector.shape_cast %102 : vector<16xf32> to vector<16x1xf32>
    %cst_35 = arith.constant 3.200000e+01 : f32
    %104 = vector.broadcast %cst_35 : f32 to vector<16x1xf32>
    %105 = arith.divf %103, %104 : vector<16x1xf32>
    %106 = vector.broadcast %105 : vector<16x1xf32> to vector<16x32xf32>
    %107 = arith.subf %101, %106 : vector<16x32xf32>
    %108 = arith.mulf %107, %107 : vector<16x32xf32>
    %cst_36 = arith.constant dense<0.000000e+00> : vector<16xf32>
    %109 = vector.multi_reduction <add>, %108, %cst_36 [1] : vector<16x32xf32> to vector<16xf32>
    %110 = vector.shape_cast %109 : vector<16xf32> to vector<16x1xf32>
    %cst_37 = arith.constant 3.200000e+01 : f32
    %111 = vector.broadcast %cst_37 : f32 to vector<16x1xf32>
    %112 = arith.divf %110, %111 : vector<16x1xf32>
    %cst_38 = arith.constant 9.99999996E-13 : f32
    %113 = vector.broadcast %cst_38 : f32 to vector<16x1xf32>
    %114 = arith.addf %112, %113 : vector<16x1xf32>
    %115 = math.rsqrt %114 : vector<16x1xf32>
    %116 = vector.broadcast %115 : vector<16x1xf32> to vector<16x32xf32>
    %117 = arith.mulf %107, %116 : vector<16x32xf32>
    %118 = vector.broadcast %90 : vector<1x32xf32> to vector<16x32xf32>
    %119 = arith.mulf %117, %118 : vector<16x32xf32>
    %120 = vector.broadcast %91 : vector<1x32xf32> to vector<16x32xf32>
    %121 = arith.addf %119, %120 : vector<16x32xf32>
    %c0_39 = arith.constant 0 : index
    %c0_40 = arith.constant 0 : index
    %c0_41 = arith.constant 0 : index
    %122 = vector.load %arg6[%c0_39, %c0_40, %c0_41] : memref<2x32x64xbf16, #tpu.memory_space<vmem>>, vector<1x32x64xbf16>
    %123 = vector.shape_cast %122 : vector<1x32x64xbf16> to vector<32x64xbf16>
    %124 = arith.truncf %121 : vector<16x32xf32> to vector<16x32xbf16>
    %cst_42 = arith.constant dense<0.000000e+00> : vector<16x64xf32>
    %125 = tpu.matmul %124, %123, %cst_42 {dimension_numbers = #tpu.dot_dimension_numbers<[1], [0], [0], [1], [0, 0, 1, 1], [], []>} : vector<16x32xbf16>, vector<32x64xbf16>, vector<16x64xf32> -> vector<16x64xf32>
    %c0_43 = arith.constant 0 : index
    %c0_44 = arith.constant 0 : index
    %c0_45 = arith.constant 0 : index
    %126 = vector.load %arg7[%c0_43, %c0_44, %c0_45] : memref<2x1x64xf32, #tpu.memory_space<vmem>>, vector<1x1x64xf32>
    %127 = vector.shape_cast %126 : vector<1x1x64xf32> to vector<1x64xf32>
    %128 = vector.broadcast %127 : vector<1x64xf32> to vector<16x64xf32>
    %129 = arith.addf %125, %128 : vector<16x64xf32>
    %cst_46 = arith.constant 5.000000e-01 : f32
    %130 = vector.broadcast %cst_46 : f32 to vector<16x64xf32>
    %131 = arith.mulf %130, %129 : vector<16x64xf32>
    %cst_47 = arith.constant 4.471500e-02 : f32
    %132 = vector.broadcast %cst_47 : f32 to vector<16x64xf32>
    %133 = arith.mulf %132, %129 : vector<16x64xf32>
    %134 = arith.mulf %133, %129 : vector<16x64xf32>
    %135 = arith.mulf %134, %129 : vector<16x64xf32>
    %136 = arith.addf %129, %135 : vector<16x64xf32>
    %cst_48 = arith.constant 0.797884583 : f32
    %137 = vector.broadcast %cst_48 : f32 to vector<16x64xf32>
    %138 = arith.mulf %137, %136 : vector<16x64xf32>
    %139 = math.tanh %138 : vector<16x64xf32>
    %cst_49 = arith.constant 1.000000e+00 : f32
    %140 = vector.broadcast %cst_49 : f32 to vector<16x64xf32>
    %141 = arith.addf %140, %139 : vector<16x64xf32>
    %142 = arith.mulf %131, %141 : vector<16x64xf32>
    %c0_50 = arith.constant 0 : index
    %c0_51 = arith.constant 0 : index
    %c0_52 = arith.constant 0 : index
    %143 = vector.load %arg8[%c0_50, %c0_51, %c0_52] : memref<2x64x32xbf16, #tpu.memory_space<vmem>>, vector<1x64x32xbf16>
    %144 = vector.shape_cast %143 : vector<1x64x32xbf16> to vector<64x32xbf16>
    %145 = arith.truncf %142 : vector<16x64xf32> to vector<16x64xbf16>
    %cst_53 = arith.constant dense<0.000000e+00> : vector<16x32xf32>
    %146 = tpu.matmul %145, %144, %cst_53 {dimension_numbers = #tpu.dot_dimension_numbers<[1], [0], [0], [1], [0, 0, 1, 1], [], []>} : vector<16x64xbf16>, vector<64x32xbf16>, vector<16x32xf32> -> vector<16x32xf32>
    %147 = vector.broadcast %92 : vector<1x32xf32> to vector<16x32xf32>
    %148 = arith.addf %146, %147 : vector<16x32xf32>
    %149 = arith.addf %121, %148 : vector<16x32xf32>
    %cst_54 = arith.constant dense<0.000000e+00> : vector<16xf32>
    %150 = vector.multi_reduction <add>, %149, %cst_54 [1] : vector<16x32xf32> to vector<16xf32>
    %151 = vector.shape_cast %150 : vector<16xf32> to vector<16x1xf32>
    %cst_55 = arith.constant 3.200000e+01 : f32
    %152 = vector.broadcast %cst_55 : f32 to vector<16x1xf32>
    %153 = arith.divf %151, %152 : vector<16x1xf32>
    %154 = vector.broadcast %153 : vector<16x1xf32> to vector<16x32xf32>
    %155 = arith.subf %149, %154 : vector<16x32xf32>
    %156 = arith.mulf %155, %155 : vector<16x32xf32>
    %cst_56 = arith.constant dense<0.000000e+00> : vector<16xf32>
    %157 = vector.multi_reduction <add>, %156, %cst_56 [1] : vector<16x32xf32> to vector<16xf32>
    %158 = vector.shape_cast %157 : vector<16xf32> to vector<16x1xf32>
    %cst_57 = arith.constant 3.200000e+01 : f32
    %159 = vector.broadcast %cst_57 : f32 to vector<16x1xf32>
    %160 = arith.divf %158, %159 : vector<16x1xf32>
    %cst_58 = arith.constant 9.99999996E-13 : f32
    %161 = vector.broadcast %cst_58 : f32 to vector<16x1xf32>
    %162 = arith.addf %160, %161 : vector<16x1xf32>
    %163 = math.rsqrt %162 : vector<16x1xf32>
    %164 = vector.broadcast %163 : vector<16x1xf32> to vector<16x32xf32>
    %165 = arith.mulf %155, %164 : vector<16x32xf32>
    %166 = vector.broadcast %93 : vector<1x32xf32> to vector<16x32xf32>
    %167 = arith.mulf %165, %166 : vector<16x32xf32>
    %168 = vector.broadcast %94 : vector<1x32xf32> to vector<16x32xf32>
    %169 = arith.addf %167, %168 : vector<16x32xf32>
    %c1 = arith.constant 1 : index
    %c0_59 = arith.constant 0 : index
    %c0_60 = arith.constant 0 : index
    %170 = vector.load %arg3[%c1, %c0_59, %c0_60] : memref<2x32x96xbf16, #tpu.memory_space<vmem>>, vector<1x32x96xbf16>
    %171 = vector.shape_cast %170 : vector<1x32x96xbf16> to vector<32x96xbf16>
    %172 = arith.truncf %169 : vector<16x32xf32> to vector<16x32xbf16>
    %cst_61 = arith.constant dense<0.000000e+00> : vector<16x96xf32>
    %173 = tpu.matmul %172, %171, %cst_61 {dimension_numbers = #tpu.dot_dimension_numbers<[1], [0], [0], [1], [0, 0, 1, 1], [], []>} : vector<16x32xbf16>, vector<32x96xbf16>, vector<16x96xf32> -> vector<16x96xf32>
    %c1_62 = arith.constant 1 : index
    %c0_63 = arith.constant 0 : index
    %c0_64 = arith.constant 0 : index
    %174 = vector.load %arg4[%c1_62, %c0_63, %c0_64] : memref<2x1x96xf32, #tpu.memory_space<vmem>>, vector<1x1x96xf32>
    %175 = vector.shape_cast %174 : vector<1x1x96xf32> to vector<1x96xf32>
    %176 = vector.broadcast %175 : vector<1x96xf32> to vector<16x96xf32>
    %177 = arith.addf %173, %176 : vector<16x96xf32>
    %178 = vector.extract_strided_slice %177 {offsets = [0, 0], sizes = [16, 32], strides = [1, 1]} : vector<16x96xf32> to vector<16x32xf32>
    %179 = vector.shape_cast %178 : vector<16x32xf32> to vector<2x8x32xf32>
    %180 = vector.extract_strided_slice %177 {offsets = [0, 32], sizes = [16, 32], strides = [1, 1]} : vector<16x96xf32> to vector<16x32xf32>
    %181 = vector.shape_cast %180 : vector<16x32xf32> to vector<2x8x32xf32>
    %182 = vector.extract_strided_slice %177 {offsets = [0, 64], sizes = [16, 32], strides = [1, 1]} : vector<16x96xf32> to vector<16x32xf32>
    %183 = vector.shape_cast %182 : vector<16x32xf32> to vector<2x8x32xf32>
    %184 = vector.extract_strided_slice %179 {offsets = [0, 0, 0], sizes = [2, 8, 16], strides = [1, 1, 1]} : vector<2x8x32xf32> to vector<2x8x16xf32>
    %185 = arith.truncf %184 : vector<2x8x16xf32> to vector<2x8x16xbf16>
    %186 = vector.extract_strided_slice %181 {offsets = [0, 0, 0], sizes = [2, 8, 16], strides = [1, 1, 1]} : vector<2x8x32xf32> to vector<2x8x16xf32>
    %187 = arith.truncf %186 : vector<2x8x16xf32> to vector<2x8x16xbf16>
    %188 = vector.extract_strided_slice %183 {offsets = [0, 0, 0], sizes = [2, 8, 16], strides = [1, 1, 1]} : vector<2x8x32xf32> to vector<2x8x16xf32>
    %189 = arith.truncf %188 : vector<2x8x16xf32> to vector<2x8x16xbf16>
    "tpu.trace_start"() <{level = 10 : i32, message = "bqd,bkd->bqk"}> : () -> ()
    %cst_65 = arith.constant dense<0.000000e+00> : vector<2x8x8xf32>
    %190 = tpu.matmul %185, %187, %cst_65 {dimension_numbers = #tpu.dot_dimension_numbers<[2], [2], [1], [1], [0, 0, 0, 1, 1, 1], [0], [0]>} : vector<2x8x16xbf16>, vector<2x8x16xbf16>, vector<2x8x8xf32> -> vector<2x8x8xf32>
    "tpu.trace_stop"() : () -> ()
    %cst_66 = arith.constant 2.500000e-01 : f32
    %191 = vector.broadcast %cst_66 : f32 to vector<2x8x8xf32>
    %192 = arith.mulf %190, %191 : vector<2x8x8xf32>
    %193 = vector.broadcast %24 : vector<2x1x8xf32> to vector<2x8x8xf32>
    %194 = arith.addf %192, %193 : vector<2x8x8xf32>
    %cst_67 = arith.constant dense<0xFF800000> : vector<2x8xf32>
    %195 = vector.multi_reduction <maximumf>, %194, %cst_67 [2] : vector<2x8x8xf32> to vector<2x8xf32>
    %196 = vector.shape_cast %195 : vector<2x8xf32> to vector<2x8x1xf32>
    %197 = vector.broadcast %196 : vector<2x8x1xf32> to vector<2x8x8xf32>
    %198 = arith.subf %194, %197 : vector<2x8x8xf32>
    %199 = math.exp %198 : vector<2x8x8xf32>
    %cst_68 = arith.constant dense<0.000000e+00> : vector<2x8xf32>
    %200 = vector.multi_reduction <add>, %199, %cst_68 [2] : vector<2x8x8xf32> to vector<2x8xf32>
    %201 = vector.shape_cast %200 : vector<2x8xf32> to vector<2x8x1xf32>
    %202 = tpu.reciprocal %201 {approx = true} : vector<2x8x1xf32> -> vector<2x8x1xf32>
    %203 = vector.broadcast %202 : vector<2x8x1xf32> to vector<2x8x8xf32>
    %204 = arith.mulf %199, %203 : vector<2x8x8xf32>
    %205 = arith.truncf %204 : vector<2x8x8xf32> to vector<2x8x8xbf16>
    "tpu.trace_start"() <{level = 10 : i32, message = "bqk,bkd->bqd"}> : () -> ()
    %cst_69 = arith.constant dense<0.000000e+00> : vector<2x8x16xf32>
    %206 = tpu.matmul %205, %189, %cst_69 {dimension_numbers = #tpu.dot_dimension_numbers<[2], [1], [1], [2], [0, 0, 0, 1, 1, 2], [0], [0]>} : vector<2x8x8xbf16>, vector<2x8x16xbf16>, vector<2x8x16xf32> -> vector<2x8x16xf32>
    "tpu.trace_stop"() : () -> ()
    %207 = vector.extract_strided_slice %179 {offsets = [0, 0, 16], sizes = [2, 8, 16], strides = [1, 1, 1]} : vector<2x8x32xf32> to vector<2x8x16xf32>
    %208 = arith.truncf %207 : vector<2x8x16xf32> to vector<2x8x16xbf16>
    %209 = vector.extract_strided_slice %181 {offsets = [0, 0, 16], sizes = [2, 8, 16], strides = [1, 1, 1]} : vector<2x8x32xf32> to vector<2x8x16xf32>
    %210 = arith.truncf %209 : vector<2x8x16xf32> to vector<2x8x16xbf16>
    %211 = vector.extract_strided_slice %183 {offsets = [0, 0, 16], sizes = [2, 8, 16], strides = [1, 1, 1]} : vector<2x8x32xf32> to vector<2x8x16xf32>
    %212 = arith.truncf %211 : vector<2x8x16xf32> to vector<2x8x16xbf16>
    "tpu.trace_start"() <{level = 10 : i32, message = "bqd,bkd->bqk"}> : () -> ()
    %cst_70 = arith.constant dense<0.000000e+00> : vector<2x8x8xf32>
    %213 = tpu.matmul %208, %210, %cst_70 {dimension_numbers = #tpu.dot_dimension_numbers<[2], [2], [1], [1], [0, 0, 0, 1, 1, 1], [0], [0]>} : vector<2x8x16xbf16>, vector<2x8x16xbf16>, vector<2x8x8xf32> -> vector<2x8x8xf32>
    "tpu.trace_stop"() : () -> ()
    %cst_71 = arith.constant 2.500000e-01 : f32
    %214 = vector.broadcast %cst_71 : f32 to vector<2x8x8xf32>
    %215 = arith.mulf %213, %214 : vector<2x8x8xf32>
    %216 = vector.broadcast %24 : vector<2x1x8xf32> to vector<2x8x8xf32>
    %217 = arith.addf %215, %216 : vector<2x8x8xf32>
    %cst_72 = arith.constant dense<0xFF800000> : vector<2x8xf32>
    %218 = vector.multi_reduction <maximumf>, %217, %cst_72 [2] : vector<2x8x8xf32> to vector<2x8xf32>
    %219 = vector.shape_cast %218 : vector<2x8xf32> to vector<2x8x1xf32>
    %220 = vector.broadcast %219 : vector<2x8x1xf32> to vector<2x8x8xf32>
    %221 = arith.subf %217, %220 : vector<2x8x8xf32>
    %222 = math.exp %221 : vector<2x8x8xf32>
    %cst_73 = arith.constant dense<0.000000e+00> : vector<2x8xf32>
    %223 = vector.multi_reduction <add>, %222, %cst_73 [2] : vector<2x8x8xf32> to vector<2x8xf32>
    %224 = vector.shape_cast %223 : vector<2x8xf32> to vector<2x8x1xf32>
    %225 = tpu.reciprocal %224 {approx = true} : vector<2x8x1xf32> -> vector<2x8x1xf32>
    %226 = vector.broadcast %225 : vector<2x8x1xf32> to vector<2x8x8xf32>
    %227 = arith.mulf %222, %226 : vector<2x8x8xf32>
    %228 = arith.truncf %227 : vector<2x8x8xf32> to vector<2x8x8xbf16>
    "tpu.trace_start"() <{level = 10 : i32, message = "bqk,bkd->bqd"}> : () -> ()
    %cst_74 = arith.constant dense<0.000000e+00> : vector<2x8x16xf32>
    %229 = tpu.matmul %228, %212, %cst_74 {dimension_numbers = #tpu.dot_dimension_numbers<[2], [1], [1], [2], [0, 0, 0, 1, 1, 2], [0], [0]>} : vector<2x8x8xbf16>, vector<2x8x16xbf16>, vector<2x8x16xf32> -> vector<2x8x16xf32>
    "tpu.trace_stop"() : () -> ()
    %230 = tpu.concatenate %206, %229 in 2 : vector<2x8x16xf32>, vector<2x8x16xf32> -> vector<2x8x32xf32>
    %231 = vector.shape_cast %230 : vector<2x8x32xf32> to vector<16x32xf32>
    %c1_75 = arith.constant 1 : index
    %c0_76 = arith.constant 0 : index
    %c0_77 = arith.constant 0 : index
    %232 = vector.load %arg9[%c1_75, %c0_76, %c0_77] : memref<2x6x32xf32, #tpu.memory_space<vmem>>, vector<1x6x32xf32>
    %233 = vector.shape_cast %232 : vector<1x6x32xf32> to vector<6x32xf32>
    %234 = vector.extract_strided_slice %233 {offsets = [0, 0], sizes = [1, 32], strides = [1, 1]} : vector<6x32xf32> to vector<1x32xf32>
    %235 = vector.extract_strided_slice %233 {offsets = [1, 0], sizes = [1, 32], strides = [1, 1]} : vector<6x32xf32> to vector<1x32xf32>
    %236 = vector.extract_strided_slice %233 {offsets = [2, 0], sizes = [1, 32], strides = [1, 1]} : vector<6x32xf32> to vector<1x32xf32>
    %237 = vector.extract_strided_slice %233 {offsets = [3, 0], sizes = [1, 32], strides = [1, 1]} : vector<6x32xf32> to vector<1x32xf32>
    %238 = vector.extract_strided_slice %233 {offsets = [4, 0], sizes = [1, 32], strides = [1, 1]} : vector<6x32xf32> to vector<1x32xf32>
    %239 = vector.extract_strided_slice %233 {offsets = [5, 0], sizes = [1, 32], strides = [1, 1]} : vector<6x32xf32> to vector<1x32xf32>
    %c1_78 = arith.constant 1 : index
    %c0_79 = arith.constant 0 : index
    %c0_80 = arith.constant 0 : index
    %240 = vector.load %arg5[%c1_78, %c0_79, %c0_80] : memref<2x32x32xbf16, #tpu.memory_space<vmem>>, vector<1x32x32xbf16>
    %241 = vector.shape_cast %240 : vector<1x32x32xbf16> to vector<32x32xbf16>
    %242 = arith.truncf %231 : vector<16x32xf32> to vector<16x32xbf16>
    %cst_81 = arith.constant dense<0.000000e+00> : vector<16x32xf32>
    %243 = tpu.matmul %242, %241, %cst_81 {dimension_numbers = #tpu.dot_dimension_numbers<[1], [0], [0], [1], [0, 0, 1, 1], [], []>} : vector<16x32xbf16>, vector<32x32xbf16>, vector<16x32xf32> -> vector<16x32xf32>
    %244 = vector.broadcast %234 : vector<1x32xf32> to vector<16x32xf32>
    %245 = arith.addf %243, %244 : vector<16x32xf32>
    %246 = arith.addf %169, %245 : vector<16x32xf32>
    %cst_82 = arith.constant dense<0.000000e+00> : vector<16xf32>
    %247 = vector.multi_reduction <add>, %246, %cst_82 [1] : vector<16x32xf32> to vector<16xf32>
    %248 = vector.shape_cast %247 : vector<16xf32> to vector<16x1xf32>
    %cst_83 = arith.constant 3.200000e+01 : f32
    %249 = vector.broadcast %cst_83 : f32 to vector<16x1xf32>
    %250 = arith.divf %248, %249 : vector<16x1xf32>
    %251 = vector.broadcast %250 : vector<16x1xf32> to vector<16x32xf32>
    %252 = arith.subf %246, %251 : vector<16x32xf32>
    %253 = arith.mulf %252, %252 : vector<16x32xf32>
    %cst_84 = arith.constant dense<0.000000e+00> : vector<16xf32>
    %254 = vector.multi_reduction <add>, %253, %cst_84 [1] : vector<16x32xf32> to vector<16xf32>
    %255 = vector.shape_cast %254 : vector<16xf32> to vector<16x1xf32>
    %cst_85 = arith.constant 3.200000e+01 : f32
    %256 = vector.broadcast %cst_85 : f32 to vector<16x1xf32>
    %257 = arith.divf %255, %256 : vector<16x1xf32>
    %cst_86 = arith.constant 9.99999996E-13 : f32
    %258 = vector.broadcast %cst_86 : f32 to vector<16x1xf32>
    %259 = arith.addf %257, %258 : vector<16x1xf32>
    %260 = math.rsqrt %259 : vector<16x1xf32>
    %261 = vector.broadcast %260 : vector<16x1xf32> to vector<16x32xf32>
    %262 = arith.mulf %252, %261 : vector<16x32xf32>
    %263 = vector.broadcast %235 : vector<1x32xf32> to vector<16x32xf32>
    %264 = arith.mulf %262, %263 : vector<16x32xf32>
    %265 = vector.broadcast %236 : vector<1x32xf32> to vector<16x32xf32>
    %266 = arith.addf %264, %265 : vector<16x32xf32>
    %c1_87 = arith.constant 1 : index
    %c0_88 = arith.constant 0 : index
    %c0_89 = arith.constant 0 : index
    %267 = vector.load %arg6[%c1_87, %c0_88, %c0_89] : memref<2x32x64xbf16, #tpu.memory_space<vmem>>, vector<1x32x64xbf16>
    %268 = vector.shape_cast %267 : vector<1x32x64xbf16> to vector<32x64xbf16>
    %269 = arith.truncf %266 : vector<16x32xf32> to vector<16x32xbf16>
    %cst_90 = arith.constant dense<0.000000e+00> : vector<16x64xf32>
    %270 = tpu.matmul %269, %268, %cst_90 {dimension_numbers = #tpu.dot_dimension_numbers<[1], [0], [0], [1], [0, 0, 1, 1], [], []>} : vector<16x32xbf16>, vector<32x64xbf16>, vector<16x64xf32> -> vector<16x64xf32>
    %c1_91 = arith.constant 1 : index
    %c0_92 = arith.constant 0 : index
    %c0_93 = arith.constant 0 : index
    %271 = vector.load %arg7[%c1_91, %c0_92, %c0_93] : memref<2x1x64xf32, #tpu.memory_space<vmem>>, vector<1x1x64xf32>
    %272 = vector.shape_cast %271 : vector<1x1x64xf32> to vector<1x64xf32>
    %273 = vector.broadcast %272 : vector<1x64xf32> to vector<16x64xf32>
    %274 = arith.addf %270, %273 : vector<16x64xf32>
    %cst_94 = arith.constant 5.000000e-01 : f32
    %275 = vector.broadcast %cst_94 : f32 to vector<16x64xf32>
    %276 = arith.mulf %275, %274 : vector<16x64xf32>
    %cst_95 = arith.constant 4.471500e-02 : f32
    %277 = vector.broadcast %cst_95 : f32 to vector<16x64xf32>
    %278 = arith.mulf %277, %274 : vector<16x64xf32>
    %279 = arith.mulf %278, %274 : vector<16x64xf32>
    %280 = arith.mulf %279, %274 : vector<16x64xf32>
    %281 = arith.addf %274, %280 : vector<16x64xf32>
    %cst_96 = arith.constant 0.797884583 : f32
    %282 = vector.broadcast %cst_96 : f32 to vector<16x64xf32>
    %283 = arith.mulf %282, %281 : vector<16x64xf32>
    %284 = math.tanh %283 : vector<16x64xf32>
    %cst_97 = arith.constant 1.000000e+00 : f32
    %285 = vector.broadcast %cst_97 : f32 to vector<16x64xf32>
    %286 = arith.addf %285, %284 : vector<16x64xf32>
    %287 = arith.mulf %276, %286 : vector<16x64xf32>
    %c1_98 = arith.constant 1 : index
    %c0_99 = arith.constant 0 : index
    %c0_100 = arith.constant 0 : index
    %288 = vector.load %arg8[%c1_98, %c0_99, %c0_100] : memref<2x64x32xbf16, #tpu.memory_space<vmem>>, vector<1x64x32xbf16>
    %289 = vector.shape_cast %288 : vector<1x64x32xbf16> to vector<64x32xbf16>
    %290 = arith.truncf %287 : vector<16x64xf32> to vector<16x64xbf16>
    %cst_101 = arith.constant dense<0.000000e+00> : vector<16x32xf32>
    %291 = tpu.matmul %290, %289, %cst_101 {dimension_numbers = #tpu.dot_dimension_numbers<[1], [0], [0], [1], [0, 0, 1, 1], [], []>} : vector<16x64xbf16>, vector<64x32xbf16>, vector<16x32xf32> -> vector<16x32xf32>
    %292 = vector.broadcast %237 : vector<1x32xf32> to vector<16x32xf32>
    %293 = arith.addf %291, %292 : vector<16x32xf32>
    %294 = arith.addf %266, %293 : vector<16x32xf32>
    %cst_102 = arith.constant dense<0.000000e+00> : vector<16xf32>
    %295 = vector.multi_reduction <add>, %294, %cst_102 [1] : vector<16x32xf32> to vector<16xf32>
    %296 = vector.shape_cast %295 : vector<16xf32> to vector<16x1xf32>
    %cst_103 = arith.constant 3.200000e+01 : f32
    %297 = vector.broadcast %cst_103 : f32 to vector<16x1xf32>
    %298 = arith.divf %296, %297 : vector<16x1xf32>
    %299 = vector.broadcast %298 : vector<16x1xf32> to vector<16x32xf32>
    %300 = arith.subf %294, %299 : vector<16x32xf32>
    %301 = arith.mulf %300, %300 : vector<16x32xf32>
    %cst_104 = arith.constant dense<0.000000e+00> : vector<16xf32>
    %302 = vector.multi_reduction <add>, %301, %cst_104 [1] : vector<16x32xf32> to vector<16xf32>
    %303 = vector.shape_cast %302 : vector<16xf32> to vector<16x1xf32>
    %cst_105 = arith.constant 3.200000e+01 : f32
    %304 = vector.broadcast %cst_105 : f32 to vector<16x1xf32>
    %305 = arith.divf %303, %304 : vector<16x1xf32>
    %cst_106 = arith.constant 9.99999996E-13 : f32
    %306 = vector.broadcast %cst_106 : f32 to vector<16x1xf32>
    %307 = arith.addf %305, %306 : vector<16x1xf32>
    %308 = math.rsqrt %307 : vector<16x1xf32>
    %309 = vector.broadcast %308 : vector<16x1xf32> to vector<16x32xf32>
    %310 = arith.mulf %300, %309 : vector<16x32xf32>
    %311 = vector.broadcast %238 : vector<1x32xf32> to vector<16x32xf32>
    %312 = arith.mulf %310, %311 : vector<16x32xf32>
    %313 = vector.broadcast %239 : vector<1x32xf32> to vector<16x32xf32>
    %314 = arith.addf %312, %313 : vector<16x32xf32>
    %315 = vector.shape_cast %314 : vector<16x32xf32> to vector<2x8x32xf32>
    %316 = vector.extract_strided_slice %315 {offsets = [0, 0, 0], sizes = [2, 1, 32], strides = [1, 1, 1]} : vector<2x8x32xf32> to vector<2x1x32xf32>
    %317 = vector.shape_cast %316 : vector<2x1x32xf32> to vector<2x32xf32>
    %c0_107 = arith.constant 0 : index
    %c0_108 = arith.constant 0 : index
    %318 = vector.load %arg10[%c0_107, %c0_108] : memref<32x32xbf16, #tpu.memory_space<vmem>>, vector<32x32xbf16>
    %319 = arith.truncf %317 : vector<2x32xf32> to vector<2x32xbf16>
    %cst_109 = arith.constant dense<0.000000e+00> : vector<2x32xf32>
    %320 = tpu.matmul %319, %318, %cst_109 {dimension_numbers = #tpu.dot_dimension_numbers<[1], [0], [0], [1], [0, 0, 1, 1], [], []>} : vector<2x32xbf16>, vector<32x32xbf16>, vector<2x32xf32> -> vector<2x32xf32>
    %c0_110 = arith.constant 0 : index
    %c0_111 = arith.constant 0 : index
    %321 = vector.load %arg11[%c0_110, %c0_111] : memref<1x32xf32, #tpu.memory_space<vmem>>, vector<1x32xf32>
    %322 = vector.broadcast %321 : vector<1x32xf32> to vector<2x32xf32>
    %323 = arith.addf %320, %322 : vector<2x32xf32>
    %324 = math.tanh %323 : vector<2x32xf32>
    %c0_112 = arith.constant 0 : index
    %c0_113 = arith.constant 0 : index
    %325 = vector.load %arg12[%c0_112, %c0_113] : memref<32x1xbf16, #tpu.memory_space<vmem>>, vector<32x1xbf16>
    %326 = arith.truncf %324 : vector<2x32xf32> to vector<2x32xbf16>
    %cst_114 = arith.constant dense<0.000000e+00> : vector<2x1xf32>
    %327 = tpu.matmul %326, %325, %cst_114 {dimension_numbers = #tpu.dot_dimension_numbers<[1], [0], [0], [1], [0, 0, 1, 1], [], []>} : vector<2x32xbf16>, vector<32x1xbf16>, vector<2x1xf32> -> vector<2x1xf32>
    %c0_115 = arith.constant 0 : index
    %c0_116 = arith.constant 0 : index
    %328 = vector.load %arg13[%c0_115, %c0_116] : memref<1x1xf32, #tpu.memory_space<vmem>>, vector<1x1xf32>
    %329 = vector.broadcast %328 : vector<1x1xf32> to vector<2x1xf32>
    %330 = arith.addf %327, %329 : vector<2x1xf32>
    %c0_117 = arith.constant 0 : index
    %c0_118 = arith.constant 0 : index
    %331 = vector.load %arg14[%c0_117, %c0_118] : memref<2x1xf32, #tpu.memory_space<vmem>>, vector<2x1xf32>
    tpu.vector_store %arg14[%c0_117, %c0_118], %330 {strides = array<i32>} : memref<2x1xf32, #tpu.memory_space<vmem>>, vector<2x1xf32>,
    return
  }
}

</mosaic_0001>

<llo_original>
// kernel: bert_classifier_forward.1
$region0: #{bert_classifier_forward.1}
  #allocation0 [shape = 'u32[]', space=smem, size = 0x4, offset = 0x4, fixed_abs, tag = 'smem constant byte address 0x4 - core index']
  #allocation1 [shape = 'u32[144,128]{1,0:T(1,128)}', space=vmem, size = 0x12000, scoped, tag = 'internal scratch']
  #allocation2 [shape = 'f32[1,1]{1,0:T(1,128)S(1)}', space=vmem, size = 0x200, scoped, tag = 'scoped memory for bert_classifier_forward.1']
  %s0 = inlined_call_operand.vmem [shape: f32[16,32], index: 0, kind: input, shape index: {}]
  %s1 = inlined_call_operand.vmem [shape: f32[2,1,8], index: 1, kind: input, shape index: {}]
  %s2 = inlined_call_operand.vmem [shape: f32[2,32], index: 2, kind: input, shape index: {}]
  %s3 = inlined_call_operand.vmem [shape: bf16[2,32,96], index: 3, kind: input, shape index: {}]
  %s4 = inlined_call_operand.vmem [shape: f32[2,1,96], index: 4, kind: input, shape index: {}]
  %s5 = inlined_call_operand.vmem [shape: bf16[2,32,32], index: 5, kind: input, shape index: {}]
  %s6 = inlined_call_operand.vmem [shape: bf16[2,32,64], index: 6, kind: input, shape index: {}]
  %s7 = inlined_call_operand.vmem [shape: f32[2,1,64], index: 7, kind: input, shape index: {}]
  %s8 = inlined_call_operand.vmem [shape: bf16[2,64,32], index: 8, kind: input, shape index: {}]
  %s9 = inlined_call_operand.vmem [shape: f32[2,6,32], index: 9, kind: input, shape index: {}]
  %s10 = inlined_call_operand.vmem [shape: bf16[32,32], index: 10, kind: input, shape index: {}]
  %s11 = inlined_call_operand.vmem [shape: f32[1,32], index: 11, kind: input, shape index: {}]
  %s12 = inlined_call_operand.vmem [shape: bf16[32,1], index: 12, kind: input, shape index: {}]
  %s13 = inlined_call_operand.<no memory space> [shape: f32[1,1], index: 13, kind: input, shape index: {}]
  %s14 = inlined_call_operand.vmem [shape: f32[2,1], index: 14, kind: output, shape index: {}]
  %s15 = sld [smem:[#allocation0]]
  $region66: #{bert_classifier_forward.1} parent=0
    _
  %s17 = ssub.s32 1, %s15
  %s18 = scalar_select 0, %s17, %s15
  %v19 = vstv %s13
  %20 = vst [vmem:[#allocation2] sm:$0x1] %v19
  // Predicated region
  $region2: #{bert_classifier_forward.1} parent=0 // pred_check
    _
  $region3: #{bert_classifier_forward.1} parent=0 // pred_check_branch
    %22 = sbr.rel (0) target = $region5
  $region4: #{bert_classifier_forward.1} parent=0 // pred_region
    _
  $region5: #{bert_classifier_forward.1} parent=0 // pred_fallthru
    _
  // Predicated region
  $region6: #{bert_classifier_forward.1} parent=0 // pred_check
    _
  $region7: #{bert_classifier_forward.1} parent=0 // pred_check_branch
    %24 = sbr.rel (0) target = $region9
  $region8: #{bert_classifier_forward.1} parent=0 // pred_region
    _
  $region9: #{bert_classifier_forward.1} parent=0 // pred_fallthru
    _
  // Predicated region
  $region10: #{bert_classifier_forward.1} parent=0 // pred_check
    _
  $region11: #{bert_classifier_forward.1} parent=0 // pred_check_branch
    %26 = sbr.rel (0) target = $region13
  $region12: #{bert_classifier_forward.1} parent=0 // pred_region
    _
  $region13: #{bert_classifier_forward.1} parent=0 // pred_fallthru
    _
  // Predicated region
  $region14: #{bert_classifier_forward.1} parent=0 // pred_check
    _
  $region15: #{bert_classifier_forward.1} parent=0 // pred_check_branch
    %28 = sbr.rel (0) target = $region17
  $region16: #{bert_classifier_forward.1} parent=0 // pred_region
    _
  $region17: #{bert_classifier_forward.1} parent=0 // pred_fallthru
    _
  // Predicated region
  $region18: #{bert_classifier_forward.1} parent=0 // pred_check
    _
  $region19: #{bert_classifier_forward.1} parent=0 // pred_check_branch
    %30 = sbr.rel (0) target = $region21
  $region20: #{bert_classifier_forward.1} parent=0 // pred_region
    _
  $region21: #{bert_classifier_forward.1} parent=0 // pred_fallthru
    _
  // Predicated region
  $region22: #{bert_classifier_forward.1} parent=0 // pred_check
    _
  $region23: #{bert_classifier_forward.1} parent=0 // pred_check_branch
    %32 = sbr.rel (0) target = $region25
  $region24: #{bert_classifier_forward.1} parent=0 // pred_region
    _
  $region25: #{bert_classifier_forward.1} parent=0 // pred_fallthru
    _
  // Predicated region
  $region26: #{bert_classifier_forward.1} parent=0 // pred_check
    _
  $region27: #{bert_classifier_forward.1} parent=0 // pred_check_branch
    %34 = sbr.rel (0) target = $region29
  $region28: #{bert_classifier_forward.1} parent=0 // pred_region
    _
  $region29: #{bert_classifier_forward.1} parent=0 // pred_fallthru
    _
  // Predicated region
  $region30: #{bert_classifier_forward.1} parent=0 // pred_check
    _
  $region31: #{bert_classifier_forward.1} parent=0 // pred_check_branch
    %36 = sbr.rel (0) target = $region33
  $region32: #{bert_classifier_forward.1} parent=0 // pred_region
    _
  $region33: #{bert_classifier_forward.1} parent=0 // pred_fallthru
    _
  // Predicated region
  $region34: #{bert_classifier_forward.1} parent=0 // pred_check
    _
  $region35: #{bert_classifier_forward.1} parent=0 // pred_check_branch
    %38 = sbr.rel (0) target = $region37
  $region36: #{bert_classifier_forward.1} parent=0 // pred_region
    _
  $region37: #{bert_classifier_forward.1} parent=0 // pred_fallthru
    _
  // Predicated region
  $region38: #{bert_classifier_forward.1} parent=0 // pred_check
    _
  $region39: #{bert_classifier_forward.1} parent=0 // pred_check_branch
    %40 = sbr.rel (0) target = $region41
  $region40: #{bert_classifier_forward.1} parent=0 // pred_region
    _
  $region41: #{bert_classifier_forward.1} parent=0 // pred_fallthru
    _
  // Predicated region
  $region42: #{bert_classifier_forward.1} parent=0 // pred_check
    _
  $region43: #{bert_classifier_forward.1} parent=0 // pred_check_branch
    %42 = sbr.rel (0) target = $region45
  $region44: #{bert_classifier_forward.1} parent=0 // pred_region
    _
  $region45: #{bert_classifier_forward.1} parent=0 // pred_fallthru
    _
  // Predicated region
  $region46: #{bert_classifier_forward.1} parent=0 // pred_check
    _
  $region47: #{bert_classifier_forward.1} parent=0 // pred_check_branch
    %44 = sbr.rel (0) target = $region49
  $region48: #{bert_classifier_forward.1} parent=0 // pred_region
    _
  $region49: #{bert_classifier_forward.1} parent=0 // pred_fallthru
    _
  // Predicated region
  $region50: #{bert_classifier_forward.1} parent=0 // pred_check
    _
  $region51: #{bert_classifier_forward.1} parent=0 // pred_check_branch
    %46 = sbr.rel (0) target = $region53
  $region52: #{bert_classifier_forward.1} parent=0 // pred_region
    _
  $region53: #{bert_classifier_forward.1} parent=0 // pred_fallthru
    _
  // Predicated region
  $region54: #{bert_classifier_forward.1} parent=0 // pred_check
    _
  $region55: #{bert_classifier_forward.1} parent=0 // pred_check_branch
    %48 = sbr.rel (0) target = $region57
  $region56: #{bert_classifier_forward.1} parent=0 // pred_region
    _
  $region57: #{bert_classifier_forward.1} parent=0 // pred_fallthru
    _
  %v50 = vld [vmem:[%s2] sm:$0x3]
  %v51 = vld [vmem:[%s0] sm:$0xff]
  %v52 = vld [vmem:[%s0 + $0x8] sm:$0xff]
  %vm53 = vcmask 261120
  %v54 = vsel %vm53, %v51, 0.0
  %55 = vadd.xlane.f32.xlu0 %v54
  %v56 = vpop.xlane.xlu0 %55
  %v57 = vsel %vm53, %v52, 0.0
  %58 = vadd.xlane.f32.xlu0 %v57
  %v59 = vpop.xlane.xlu0 %58
  %v60 = vrcp.pop 32.0
  %v61 = vmul.f32 %v56, %v60
  %v62 = vmul.f32 %v59, %v60
  %v63 = vsub.f32 %v51, %v61
  %v64 = vsub.f32 %v52, %v62
  %v65 = vmul.f32 %v63, %v63
  %v66 = vmul.f32 %v64, %v64
  %v67 = vsel %vm53, %v65, 0.0
  %68 = vadd.xlane.f32.xlu0 %v67
  %v69 = vpop.xlane.xlu0 %68
  %v70 = vsel %vm53, %v66, 0.0
  %71 = vadd.xlane.f32.xlu0 %v70
  %v72 = vpop.xlane.xlu0 %71
  %v73 = vmul.f32 %v69, %v60
  %v74 = vmul.f32 %v72, %v60
  %v75 = vadd.f32 %v73, 1e-12
  %v76 = vadd.f32 %v74, 1e-12
  %v77 = vrsqrt.pop %v75
  %v78 = vrsqrt.pop %v76
  %v79 = vmul.f32 %v63, %v77
  %v80 = vmul.f32 %v64, %v78
  %v81 = vlaneseq
  %v82 = vshrl.u32 %v81, 7
  %v83 = vsub.s32 0, %v82
  %v84 = vrot.slane %v50, %v83
  %v85 = vmul.f32 %v79, %v84
  %v86 = vmul.f32 %v80, %v84
  %v87 = vlaneseq
  %v88 = vshrl.u32 %v87, 7
  %v89 = vsub.s32 1, %v88
  %v90 = vrot.slane %v50, %v89
  %v91 = vadd.f32 %v85, %v90
  %v92 = vadd.f32 %v86, %v90
  %v93 = vld [vmem:[%s1] sm:$0x1]
  %v94 = vld [vmem:[%s1 + $0x1] sm:$0x1]
  %v95 = vld [vmem:[%s3] sm:$0xf]
  %v96 = vld [vmem:[%s3 + $0x4] sm:$0xf]
  %v97 = vld [vmem:[%s3 + $0x8] sm:$0xf]
  %v98 = vld [vmem:[%s3 + $0xc] sm:$0xf]
  %v99 = vpack.c.bf16 %v92, %v91
  %v100 = vld [vmem:[%s4] sm:$0x1]
  %v102 = vlaneseq
  %v103 = vshrl.u32 %v102, 7
  %v104 = vsub.s32 0, %v103
  %v105 = vrot.slane %v100, %v104
  %v111 = vunpack.c.l.b16 %v95
  %v112 = vunpack.c.l.b16 %v96
  %v113 = vunpack.c.l.b16 %v97
  %v114 = vunpack.c.l.b16 %v98
  %v115 = vpack.c.b16 %v112, %v111
  %v116 = vpack.c.b16 %v114, %v113
  %v120 = vsel %vm53, %v99, 0
  %122 = vmatprep.subr.bf16.mxu0 0
  %123 = vmatpush1.bf16.msra.mxu0 %v115
  %124 = vmatprep.subr.bf16.mxu0 0
  %125 = vmatpush1.bf16.msra.mxu0 %v116
  %126 = vmatprep.subr.bf16.mxu0 0
  %127 = vmatpush1.bf16.msra.mxu0 0
  %128 = vmatprep.subr.bf16.mxu0 0
  %129 = vmatpush1.bf16.msra.mxu0 0
  %130 = vmatprep.subr.bf16.mxu0 0
  %131 = vmatpush1.bf16.msra.mxu0 0
  %132 = vmatprep.subr.bf16.mxu0 0
  %133 = vmatpush1.bf16.msra.mxu0 0
  %134 = vmatprep.subr.bf16.mxu0 0
  %135 = vmatpush1.bf16.msra.mxu0 0
  %136 = vmatprep.subr.bf16.mxu0 0
  %137 = vmatpush1.bf16.msra.mxu0 0
  %138 = vmatprep.subr.bf16.mxu0 0
  %139 = vmatpush1.bf16.msra.mxu0 0
  %140 = vmatprep.subr.bf16.mxu0 0
  %141 = vmatpush1.bf16.msra.mxu0 0
  %142 = vmatprep.subr.bf16.mxu0 0
  %143 = vmatpush1.bf16.msra.mxu0 0
  %144 = vmatprep.subr.bf16.mxu0 0
  %145 = vmatpush1.bf16.msra.mxu0 0
  %146 = vmatprep.subr.bf16.mxu0 0
  %147 = vmatpush1.bf16.msra.mxu0 0
  %148 = vmatprep.subr.bf16.mxu0 0
  %149 = vmatpush1.bf16.msra.mxu0 0
  %150 = vmatprep.subr.bf16.mxu0 0
  %151 = vmatpush1.bf16.msra.mxu0 0
  %152 = vmatprep.subr.bf16.mxu0 0
  %153 = vmatpush1.bf16.msra.mxu0 0
  %154 = vmatprep.mubr.bf16.mxu0 0
  %155 = vmatmul.mubr.bf16.gmra.mrb[0].mxu0 %v120
  %v156 = vpop.f32.mrb[0].mxu0
  %v157 = vadd.f32 %v105, %v156
  %v158 = vpop.f32.mrb[0].mxu0
  %v159 = vpop.f32.mrb[0].mxu0
  %v160 = vadd.f32 %v105, %v159
  %v161 = vpop.f32.mrb[0].mxu0
  %162 = vdwg.mxu0
  %v163 = vpack.c.bf16 %v157, %v157
  %v164 = vpack.c.bf16 %v160, %v160
  %166 = vrot.lane.b32.xlu0 %v163, 96
  %v167 = vpop.permute.xlu0 %166
  %vm168 = vcmask 130048
  %v170 = vsel %vm168, %v163, 0
  %v173 = vsel %vm168, %v167, 0
  %175 = vmatprep.subr.bf16.mxu0 0
  %176 = vmatpush1.bf16.xpose.msra.mxu0 %v173
  %177 = vmatprep.subr.bf16.mxu0 0
  %178 = vmatpush1.bf16.xpose.msra.mxu0 0
  %179 = vmatprep.subr.bf16.mxu0 0
  %180 = vmatpush1.bf16.xpose.msra.mxu0 0
  %181 = vmatprep.subr.bf16.mxu0 0
  %182 = vmatpush1.bf16.xpose.msra.mxu0 0
  %183 = vmatprep.subr.bf16.mxu0 0
  %184 = vmatpush1.bf16.xpose.msra.mxu0 0
  %185 = vmatprep.subr.bf16.mxu0 0
  %186 = vmatpush1.bf16.xpose.msra.mxu0 0
  %187 = vmatprep.subr.bf16.mxu0 0
  %188 = vmatpush1.bf16.xpose.msra.mxu0 0
  %189 = vmatprep.subr.bf16.mxu0 0
  %190 = vmatpush1.bf16.xpose.msra.mxu0 0
  %191 = vmatprep.subr.bf16.mxu0 0
  %192 = vmatpush1.bf16.xpose.msra.mxu0 0
  %193 = vmatprep.subr.bf16.mxu0 0
  %194 = vmatpush1.bf16.xpose.msra.mxu0 0
  %195 = vmatprep.subr.bf16.mxu0 0
  %196 = vmatpush1.bf16.xpose.msra.mxu0 0
  %197 = vmatprep.subr.bf16.mxu0 0
  %198 = vmatpush1.bf16.xpose.msra.mxu0 0
  %199 = vmatprep.subr.bf16.mxu0 0
  %200 = vmatpush1.bf16.xpose.msra.mxu0 0
  %201 = vmatprep.subr.bf16.mxu0 0
  %202 = vmatpush1.bf16.xpose.msra.mxu0 0
  %203 = vmatprep.subr.bf16.mxu0 0
  %204 = vmatpush1.bf16.xpose.msra.mxu0 0
  %205 = vmatprep.subr.bf16.mxu0 0
  %206 = vmatpush1.bf16.xpose.msra.mxu0 0
  %207 = vmatprep.mubr.bf16.mxu0 0
  %208 = vmatmul.mubr.bf16.gmra.mrb[0].mxu0 %v170
  %v209 = vpop.f32.mrb[0].mxu0
  %v210 = vadd.f32 0.0, %v209
  %v211 = vpop.f32.mrb[0].mxu0
  %v212 = vpop.f32.mrb[0].mxu0
  %v213 = vpop.f32.mrb[0].mxu0
  %214 = vdwg.mxu0
  %216 = vrot.lane.b32.xlu0 %v164, 96
  %v217 = vpop.permute.xlu0 %216
  %v219 = vsel %vm168, %v164, 0
  %v222 = vsel %vm168, %v217, 0
  %224 = vmatprep.subr.bf16.mxu0 0
  %225 = vmatpush1.bf16.xpose.msra.mxu0 %v222
  %226 = vmatprep.subr.bf16.mxu0 0
  %227 = vmatpush1.bf16.xpose.msra.mxu0 0
  %228 = vmatprep.subr.bf16.mxu0 0
  %229 = vmatpush1.bf16.xpose.msra.mxu0 0
  %230 = vmatprep.subr.bf16.mxu0 0
  %231 = vmatpush1.bf16.xpose.msra.mxu0 0
  %232 = vmatprep.subr.bf16.mxu0 0
  %233 = vmatpush1.bf16.xpose.msra.mxu0 0
  %234 = vmatprep.subr.bf16.mxu0 0
  %235 = vmatpush1.bf16.xpose.msra.mxu0 0
  %236 = vmatprep.subr.bf16.mxu0 0
  %237 = vmatpush1.bf16.xpose.msra.mxu0 0
  %238 = vmatprep.subr.bf16.mxu0 0
  %239 = vmatpush1.bf16.xpose.msra.mxu0 0
  %240 = vmatprep.subr.bf16.mxu0 0
  %241 = vmatpush1.bf16.xpose.msra.mxu0 0
  %242 = vmatprep.subr.bf16.mxu0 0
  %243 = vmatpush1.bf16.xpose.msra.mxu0 0
  %244 = vmatprep.subr.bf16.mxu0 0
  %245 = vmatpush1.bf16.xpose.msra.mxu0 0
  %246 = vmatprep.subr.bf16.mxu0 0
  %247 = vmatpush1.bf16.xpose.msra.mxu0 0
  %248 = vmatprep.subr.bf16.mxu0 0
  %249 = vmatpush1.bf16.xpose.msra.mxu0 0
  %250 = vmatprep.subr.bf16.mxu0 0
  %251 = vmatpush1.bf16.xpose.msra.mxu0 0
  %252 = vmatprep.subr.bf16.mxu0 0
  %253 = vmatpush1.bf16.xpose.msra.mxu0 0
  %254 = vmatprep.subr.bf16.mxu0 0
  %255 = vmatpush1.bf16.xpose.msra.mxu0 0
  %256 = vmatprep.mubr.bf16.mxu0 0
  %257 = vmatmul.mubr.bf16.gmra.mrb[0].mxu0 %v219
  %v258 = vpop.f32.mrb[0].mxu0
  %v259 = vadd.f32 0.0, %v258
  %v260 = vpop.f32.mrb[0].mxu0
  %v261 = vpop.f32.mrb[0].mxu0
  %v262 = vpop.f32.mrb[0].mxu0
  %263 = vdwg.mxu0
  %v264 = vmul.f32 %v210, 0.25
  %v265 = vmul.f32 %v259, 0.25
  %v268 = vlaneseq
  %v269 = vshrl.u32 %v268, 7
  %v270 = vsub.s32 0, %v269
  %v271 = vrot.slane %v93, %v270
  %v272 = vlaneseq
  %v273 = vshrl.u32 %v272, 7
  %v274 = vsub.s32 0, %v273
  %v275 = vrot.slane %v94, %v274
  %v278 = vadd.f32 %v264, %v271
  %v279 = vadd.f32 %v265, %v275
  %vm280 = vcmask 64512
  %v281 = vsel %vm280, %v278, -inf
  %282 = vmax.xlane.f32.xlu0 %v281
  %v283 = vpop.xlane.xlu0 %282
  %v284 = vsel %vm280, %v279, -inf
  %285 = vmax.xlane.f32.xlu0 %v284
  %v286 = vpop.xlane.xlu0 %285
  %v287 = vsub.f32 %v278, %v283
  %v288 = vsub.f32 %v279, %v286
  %v289 = vmul.f32 %v287, 1.442695
  %v290 = vpow.pop %v289
  %v291 = vmul.f32 %v288, 1.442695
  %v292 = vpow.pop %v291
  %v293 = vsel %vm280, %v290, 0.0
  %294 = vadd.xlane.f32.xlu0 %v293
  %v295 = vpop.xlane.xlu0 %294
  %v296 = vsel %vm280, %v292, 0.0
  %297 = vadd.xlane.f32.xlu0 %v296
  %v298 = vpop.xlane.xlu0 %297
  %v299 = vrcp.pop %v295
  %v300 = vrcp.pop %v298
  %v301 = vmul.f32 %v290, %v299
  %v302 = vmul.f32 %v292, %v300
  %v303 = vpack.c.bf16 %v301, %v301
  %v304 = vpack.c.bf16 %v302, %v302
  %305 = vrot.lane.b32.xlu0 %v163, 64
  %v306 = vpop.permute.xlu0 %305
  %v308 = vsel %vm280, %v303, 0
  %vm310 = vcmask 1043456
  %v312 = vsel %vm310, %v306, 0
  %314 = vmatprep.subr.bf16.mxu0 0
  %315 = vmatpush1.bf16.msra.mxu0 %v312
  %316 = vmatprep.subr.bf16.mxu0 0
  %317 = vmatpush1.bf16.msra.mxu0 0
  %318 = vmatprep.subr.bf16.mxu0 0
  %319 = vmatpush1.bf16.msra.mxu0 0
  %320 = vmatprep.subr.bf16.mxu0 0
  %321 = vmatpush1.bf16.msra.mxu0 0
  %322 = vmatprep.subr.bf16.mxu0 0
  %323 = vmatpush1.bf16.msra.mxu0 0
  %324 = vmatprep.subr.bf16.mxu0 0
  %325 = vmatpush1.bf16.msra.mxu0 0
  %326 = vmatprep.subr.bf16.mxu0 0
  %327 = vmatpush1.bf16.msra.mxu0 0
  %328 = vmatprep.subr.bf16.mxu0 0
  %329 = vmatpush1.bf16.msra.mxu0 0
  %330 = vmatprep.subr.bf16.mxu0 0
  %331 = vmatpush1.bf16.msra.mxu0 0
  %332 = vmatprep.subr.bf16.mxu0 0
  %333 = vmatpush1.bf16.msra.mxu0 0
  %334 = vmatprep.subr.bf16.mxu0 0
  %335 = vmatpush1.bf16.msra.mxu0 0
  %336 = vmatprep.subr.bf16.mxu0 0
  %337 = vmatpush1.bf16.msra.mxu0 0
  %338 = vmatprep.subr.bf16.mxu0 0
  %339 = vmatpush1.bf16.msra.mxu0 0
  %340 = vmatprep.subr.bf16.mxu0 0
  %341 = vmatpush1.bf16.msra.mxu0 0
  %342 = vmatprep.subr.bf16.mxu0 0
  %343 = vmatpush1.bf16.msra.mxu0 0
  %344 = vmatprep.subr.bf16.mxu0 0
  %345 = vmatpush1.bf16.msra.mxu0 0
  %346 = vmatprep.mubr.bf16.mxu0 0
  %347 = vmatmul.mubr.bf16.gmra.mrb[0].mxu0 %v308
  %v348 = vpop.f32.mrb[0].mxu0
  %v349 = vadd.f32 0.0, %v348
  %v350 = vpop.f32.mrb[0].mxu0
  %v351 = vpop.f32.mrb[0].mxu0
  %v352 = vpop.f32.mrb[0].mxu0
  %353 = vdwg.mxu0
  %354 = vrot.lane.b32.xlu0 %v164, 64
  %v355 = vpop.permute.xlu0 %354
  %v357 = vsel %vm280, %v304, 0
  %v360 = vsel %vm310, %v355, 0
  %362 = vmatprep.subr.bf16.mxu0 0
  %363 = vmatpush1.bf16.msra.mxu0 %v360
  %364 = vmatprep.subr.bf16.mxu0 0
  %365 = vmatpush1.bf16.msra.mxu0 0
  %366 = vmatprep.subr.bf16.mxu0 0
  %367 = vmatpush1.bf16.msra.mxu0 0
  %368 = vmatprep.subr.bf16.mxu0 0
  %369 = vmatpush1.bf16.msra.mxu0 0
  %370 = vmatprep.subr.bf16.mxu0 0
  %371 = vmatpush1.bf16.msra.mxu0 0
  %372 = vmatprep.subr.bf16.mxu0 0
  %373 = vmatpush1.bf16.msra.mxu0 0
  %374 = vmatprep.subr.bf16.mxu0 0
  %375 = vmatpush1.bf16.msra.mxu0 0
  %376 = vmatprep.subr.bf16.mxu0 0
  %377 = vmatpush1.bf16.msra.mxu0 0
  %378 = vmatprep.subr.bf16.mxu0 0
  %379 = vmatpush1.bf16.msra.mxu0 0
  %380 = vmatprep.subr.bf16.mxu0 0
  %381 = vmatpush1.bf16.msra.mxu0 0
  %382 = vmatprep.subr.bf16.mxu0 0
  %383 = vmatpush1.bf16.msra.mxu0 0
  %384 = vmatprep.subr.bf16.mxu0 0
  %385 = vmatpush1.bf16.msra.mxu0 0
  %386 = vmatprep.subr.bf16.mxu0 0
  %387 = vmatpush1.bf16.msra.mxu0 0
  %388 = vmatprep.subr.bf16.mxu0 0
  %389 = vmatpush1.bf16.msra.mxu0 0
  %390 = vmatprep.subr.bf16.mxu0 0
  %391 = vmatpush1.bf16.msra.mxu0 0
  %392 = vmatprep.subr.bf16.mxu0 0
  %393 = vmatpush1.bf16.msra.mxu0 0
  %394 = vmatprep.mubr.bf16.mxu0 0
  %395 = vmatmul.mubr.bf16.gmra.mrb[0].mxu0 %v357
  %v396 = vpop.f32.mrb[0].mxu0
  %v397 = vadd.f32 0.0, %v396
  %v398 = vpop.f32.mrb[0].mxu0
  %v399 = vpop.f32.mrb[0].mxu0
  %v400 = vpop.f32.mrb[0].mxu0
  %401 = vdwg.mxu0
  %402 = vrot.lane.b32.xlu0 %v163, 112
  %v403 = vpop.permute.xlu0 %402
  %404 = vrot.lane.b32.xlu0 %v163, 80
  %v405 = vpop.permute.xlu0 %404
  %v407 = vsel %vm168, %v403, 0
  %v410 = vsel %vm168, %v405, 0
  %412 = vmatprep.subr.bf16.mxu0 0
  %413 = vmatpush1.bf16.xpose.msra.mxu0 %v410
  %414 = vmatprep.subr.bf16.mxu0 0
  %415 = vmatpush1.bf16.xpose.msra.mxu0 0
  %416 = vmatprep.subr.bf16.mxu0 0
  %417 = vmatpush1.bf16.xpose.msra.mxu0 0
  %418 = vmatprep.subr.bf16.mxu0 0
  %419 = vmatpush1.bf16.xpose.msra.mxu0 0
  %420 = vmatprep.subr.bf16.mxu0 0
  %421 = vmatpush1.bf16.xpose.msra.mxu0 0
  %422 = vmatprep.subr.bf16.mxu0 0
  %423 = vmatpush1.bf16.xpose.msra.mxu0 0
  %424 = vmatprep.subr.bf16.mxu0 0
  %425 = vmatpush1.bf16.xpose.msra.mxu0 0
  %426 = vmatprep.subr.bf16.mxu0 0
  %427 = vmatpush1.bf16.xpose.msra.mxu0 0
  %428 = vmatprep.subr.bf16.mxu0 0
  %429 = vmatpush1.bf16.xpose.msra.mxu0 0
  %430 = vmatprep.subr.bf16.mxu0 0
  %431 = vmatpush1.bf16.xpose.msra.mxu0 0
  %432 = vmatprep.subr.bf16.mxu0 0
  %433 = vmatpush1.bf16.xpose.msra.mxu0 0
  %434 = vmatprep.subr.bf16.mxu0 0
  %435 = vmatpush1.bf16.xpose.msra.mxu0 0
  %436 = vmatprep.subr.bf16.mxu0 0
  %437 = vmatpush1.bf16.xpose.msra.mxu0 0
  %438 = vmatprep.subr.bf16.mxu0 0
  %439 = vmatpush1.bf16.xpose.msra.mxu0 0
  %440 = vmatprep.subr.bf16.mxu0 0
  %441 = vmatpush1.bf16.xpose.msra.mxu0 0
  %442 = vmatprep.subr.bf16.mxu0 0
  %443 = vmatpush1.bf16.xpose.msra.mxu0 0
  %444 = vmatprep.mubr.bf16.mxu0 0
  %445 = vmatmul.mubr.bf16.gmra.mrb[0].mxu0 %v407
  %v446 = vpop.f32.mrb[0].mxu0
  %v447 = vadd.f32 0.0, %v446
  %v448 = vpop.f32.mrb[0].mxu0
  %v449 = vpop.f32.mrb[0].mxu0
  %v450 = vpop.f32.mrb[0].mxu0
  %451 = vdwg.mxu0
  %452 = vrot.lane.b32.xlu0 %v164, 112
  %v453 = vpop.permute.xlu0 %452
  %454 = vrot.lane.b32.xlu0 %v164, 80
  %v455 = vpop.permute.xlu0 %454
  %v457 = vsel %vm168, %v453, 0
  %v460 = vsel %vm168, %v455, 0
  %462 = vmatprep.subr.bf16.mxu0 0
  %463 = vmatpush1.bf16.xpose.msra.mxu0 %v460
  %464 = vmatprep.subr.bf16.mxu0 0
  %465 = vmatpush1.bf16.xpose.msra.mxu0 0
  %466 = vmatprep.subr.bf16.mxu0 0
  %467 = vmatpush1.bf16.xpose.msra.mxu0 0
  %468 = vmatprep.subr.bf16.mxu0 0
  %469 = vmatpush1.bf16.xpose.msra.mxu0 0
  %470 = vmatprep.subr.bf16.mxu0 0
  %471 = vmatpush1.bf16.xpose.msra.mxu0 0
  %472 = vmatprep.subr.bf16.mxu0 0
  %473 = vmatpush1.bf16.xpose.msra.mxu0 0
  %474 = vmatprep.subr.bf16.mxu0 0
  %475 = vmatpush1.bf16.xpose.msra.mxu0 0
  %476 = vmatprep.subr.bf16.mxu0 0
  %477 = vmatpush1.bf16.xpose.msra.mxu0 0
  %478 = vmatprep.subr.bf16.mxu0 0
  %479 = vmatpush1.bf16.xpose.msra.mxu0 0
  %480 = vmatprep.subr.bf16.mxu0 0
  %481 = vmatpush1.bf16.xpose.msra.mxu0 0
  %482 = vmatprep.subr.bf16.mxu0 0
  %483 = vmatpush1.bf16.xpose.msra.mxu0 0
  %484 = vmatprep.subr.bf16.mxu0 0
  %485 = vmatpush1.bf16.xpose.msra.mxu0 0
  %486 = vmatprep.subr.bf16.mxu0 0
  %487 = vmatpush1.bf16.xpose.msra.mxu0 0
  %488 = vmatprep.subr.bf16.mxu0 0
  %489 = vmatpush1.bf16.xpose.msra.mxu0 0
  %490 = vmatprep.subr.bf16.mxu0 0
  %491 = vmatpush1.bf16.xpose.msra.mxu0 0
  %492 = vmatprep.subr.bf16.mxu0 0
  %493 = vmatpush1.bf16.xpose.msra.mxu0 0
  %494 = vmatprep.mubr.bf16.mxu0 0
  %495 = vmatmul.mubr.bf16.gmra.mrb[0].mxu0 %v457
  %v496 = vpop.f32.mrb[0].mxu0
  %v497 = vadd.f32 0.0, %v496
  %v498 = vpop.f32.mrb[0].mxu0
  %v499 = vpop.f32.mrb[0].mxu0
  %v500 = vpop.f32.mrb[0].mxu0
  %501 = vdwg.mxu0
  %v502 = vmul.f32 %v447, 0.25
  %v503 = vmul.f32 %v497, 0.25
  %v504 = vadd.f32 %v502, %v271
  %v505 = vadd.f32 %v503, %v275
  %v506 = vsel %vm280, %v504, -inf
  %507 = vmax.xlane.f32.xlu0 %v506
  %v508 = vpop.xlane.xlu0 %507
  %v509 = vsel %vm280, %v505, -inf
  %510 = vmax.xlane.f32.xlu0 %v509
  %v511 = vpop.xlane.xlu0 %510
  %v512 = vsub.f32 %v504, %v508
  %v513 = vsub.f32 %v505, %v511
  %v514 = vmul.f32 %v512, 1.442695
  %v515 = vpow.pop %v514
  %v516 = vmul.f32 %v513, 1.442695
  %v517 = vpow.pop %v516
  %v518 = vsel %vm280, %v515, 0.0
  %519 = vadd.xlane.f32.xlu0 %v518
  %v520 = vpop.xlane.xlu0 %519
  %v521 = vsel %vm280, %v517, 0.0
  %522 = vadd.xlane.f32.xlu0 %v521
  %v523 = vpop.xlane.xlu0 %522
  %v524 = vrcp.pop %v520
  %v525 = vrcp.pop %v523
  %v526 = vmul.f32 %v515, %v524
  %v527 = vmul.f32 %v517, %v525
  %v528 = vpack.c.bf16 %v526, %v526
  %v529 = vpack.c.bf16 %v527, %v527
  %530 = vrot.lane.b32.xlu0 %v163, 48
  %v531 = vpop.permute.xlu0 %530
  %v533 = vsel %vm280, %v528, 0
  %v536 = vsel %vm310, %v531, 0
  %538 = vmatprep.subr.bf16.mxu0 0
  %539 = vmatpush1.bf16.msra.mxu0 %v536
  %540 = vmatprep.subr.bf16.mxu0 0
  %541 = vmatpush1.bf16.msra.mxu0 0
  %542 = vmatprep.subr.bf16.mxu0 0
  %543 = vmatpush1.bf16.msra.mxu0 0
  %544 = vmatprep.subr.bf16.mxu0 0
  %545 = vmatpush1.bf16.msra.mxu0 0
  %546 = vmatprep.subr.bf16.mxu0 0
  %547 = vmatpush1.bf16.msra.mxu0 0
  %548 = vmatprep.subr.bf16.mxu0 0
  %549 = vmatpush1.bf16.msra.mxu0 0
  %550 = vmatprep.subr.bf16.mxu0 0
  %551 = vmatpush1.bf16.msra.mxu0 0
  %552 = vmatprep.subr.bf16.mxu0 0
  %553 = vmatpush1.bf16.msra.mxu0 0
  %554 = vmatprep.subr.bf16.mxu0 0
  %555 = vmatpush1.bf16.msra.mxu0 0
  %556 = vmatprep.subr.bf16.mxu0 0
  %557 = vmatpush1.bf16.msra.mxu0 0
  %558 = vmatprep.subr.bf16.mxu0 0
  %559 = vmatpush1.bf16.msra.mxu0 0
  %560 = vmatprep.subr.bf16.mxu0 0
  %561 = vmatpush1.bf16.msra.mxu0 0
  %562 = vmatprep.subr.bf16.mxu0 0
  %563 = vmatpush1.bf16.msra.mxu0 0
  %564 = vmatprep.subr.bf16.mxu0 0
  %565 = vmatpush1.bf16.msra.mxu0 0
  %566 = vmatprep.subr.bf16.mxu0 0
  %567 = vmatpush1.bf16.msra.mxu0 0
  %568 = vmatprep.subr.bf16.mxu0 0
  %569 = vmatpush1.bf16.msra.mxu0 0
  %570 = vmatprep.mubr.bf16.mxu0 0
  %571 = vmatmul.mubr.bf16.gmra.mrb[0].mxu0 %v533
  %v572 = vpop.f32.mrb[0].mxu0
  %v573 = vadd.f32 0.0, %v572
  %v574 = vpop.f32.mrb[0].mxu0
  %v575 = vpop.f32.mrb[0].mxu0
  %v576 = vpop.f32.mrb[0].mxu0
  %577 = vdwg.mxu0
  %578 = vrot.lane.b32.xlu0 %v164, 48
  %v579 = vpop.permute.xlu0 %578
  %v581 = vsel %vm280, %v529, 0
  %v584 = vsel %vm310, %v579, 0
  %586 = vmatprep.subr.bf16.mxu0 0
  %587 = vmatpush1.bf16.msra.mxu0 %v584
  %588 = vmatprep.subr.bf16.mxu0 0
  %589 = vmatpush1.bf16.msra.mxu0 0
  %590 = vmatprep.subr.bf16.mxu0 0
  %591 = vmatpush1.bf16.msra.mxu0 0
  %592 = vmatprep.subr.bf16.mxu0 0
  %593 = vmatpush1.bf16.msra.mxu0 0
  %594 = vmatprep.subr.bf16.mxu0 0
  %595 = vmatpush1.bf16.msra.mxu0 0
  %596 = vmatprep.subr.bf16.mxu0 0
  %597 = vmatpush1.bf16.msra.mxu0 0
  %598 = vmatprep.subr.bf16.mxu0 0
  %599 = vmatpush1.bf16.msra.mxu0 0
  %600 = vmatprep.subr.bf16.mxu0 0
  %601 = vmatpush1.bf16.msra.mxu0 0
  %602 = vmatprep.subr.bf16.mxu0 0
  %603 = vmatpush1.bf16.msra.mxu0 0
  %604 = vmatprep.subr.bf16.mxu0 0
  %605 = vmatpush1.bf16.msra.mxu0 0
  %606 = vmatprep.subr.bf16.mxu0 0
  %607 = vmatpush1.bf16.msra.mxu0 0
  %608 = vmatprep.subr.bf16.mxu0 0
  %609 = vmatpush1.bf16.msra.mxu0 0
  %610 = vmatprep.subr.bf16.mxu0 0
  %611 = vmatpush1.bf16.msra.mxu0 0
  %612 = vmatprep.subr.bf16.mxu0 0
  %613 = vmatpush1.bf16.msra.mxu0 0
  %614 = vmatprep.subr.bf16.mxu0 0
  %615 = vmatpush1.bf16.msra.mxu0 0
  %616 = vmatprep.subr.bf16.mxu0 0
  %617 = vmatpush1.bf16.msra.mxu0 0
  %618 = vmatprep.mubr.bf16.mxu0 0
  %619 = vmatmul.mubr.bf16.gmra.mrb[0].mxu0 %v581
  %v620 = vpop.f32.mrb[0].mxu0
  %v621 = vadd.f32 0.0, %v620
  %v622 = vpop.f32.mrb[0].mxu0
  %v623 = vpop.f32.mrb[0].mxu0
  %v624 = vpop.f32.mrb[0].mxu0
  %625 = vdwg.mxu0
  %628 = vrot.lane.b32.xlu0 %v573, 16
  %v629 = vpop.permute.xlu0 %628
  %630 = vrot.lane.b32.xlu0 %v621, 16
  %v631 = vpop.permute.xlu0 %630
  %v634 = vsel %vm168, %v349, %v629
  %v635 = vsel %vm168, %v397, %v631
  %v636 = vld [vmem:[%s9] sm:$0x3f]
  %v637 = vld [vmem:[%s5] sm:$0xf]
  %v638 = vld [vmem:[%s5 + $0x4] sm:$0xf]
  %v639 = vld [vmem:[%s5 + $0x8] sm:$0xf]
  %v640 = vld [vmem:[%s5 + $0xc] sm:$0xf]
  %v641 = vpack.c.bf16 %v635, %v634
  %v642 = vlaneseq
  %v643 = vshrl.u32 %v642, 7
  %v644 = vsub.s32 0, %v643
  %v645 = vrot.slane %v636, %v644
  %v650 = vunpack.c.l.b16 %v637
  %v651 = vunpack.c.l.b16 %v638
  %v652 = vunpack.c.l.b16 %v639
  %v653 = vunpack.c.l.b16 %v640
  %v654 = vpack.c.b16 %v651, %v650
  %v655 = vpack.c.b16 %v653, %v652
  %v659 = vsel %vm53, %v641, 0
  %661 = vmatprep.subr.bf16.mxu0 0
  %662 = vmatpush1.bf16.msra.mxu0 %v654
  %663 = vmatprep.subr.bf16.mxu0 0
  %664 = vmatpush1.bf16.msra.mxu0 %v655
  %665 = vmatprep.subr.bf16.mxu0 0
  %666 = vmatpush1.bf16.msra.mxu0 0
  %667 = vmatprep.subr.bf16.mxu0 0
  %668 = vmatpush1.bf16.msra.mxu0 0
  %669 = vmatprep.subr.bf16.mxu0 0
  %670 = vmatpush1.bf16.msra.mxu0 0
  %671 = vmatprep.subr.bf16.mxu0 0
  %672 = vmatpush1.bf16.msra.mxu0 0
  %673 = vmatprep.subr.bf16.mxu0 0
  %674 = vmatpush1.bf16.msra.mxu0 0
  %675 = vmatprep.subr.bf16.mxu0 0
  %676 = vmatpush1.bf16.msra.mxu0 0
  %677 = vmatprep.subr.bf16.mxu0 0
  %678 = vmatpush1.bf16.msra.mxu0 0
  %679 = vmatprep.subr.bf16.mxu0 0
  %680 = vmatpush1.bf16.msra.mxu0 0
  %681 = vmatprep.subr.bf16.mxu0 0
  %682 = vmatpush1.bf16.msra.mxu0 0
  %683 = vmatprep.subr.bf16.mxu0 0
  %684 = vmatpush1.bf16.msra.mxu0 0
  %685 = vmatprep.subr.bf16.mxu0 0
  %686 = vmatpush1.bf16.msra.mxu0 0
  %687 = vmatprep.subr.bf16.mxu0 0
  %688 = vmatpush1.bf16.msra.mxu0 0
  %689 = vmatprep.subr.bf16.mxu0 0
  %690 = vmatpush1.bf16.msra.mxu0 0
  %691 = vmatprep.subr.bf16.mxu0 0
  %692 = vmatpush1.bf16.msra.mxu0 0
  %693 = vmatprep.mubr.bf16.mxu0 0
  %694 = vmatmul.mubr.bf16.gmra.mrb[0].mxu0 %v659
  %v695 = vpop.f32.mrb[0].mxu0
  %v696 = vadd.f32 %v645, %v695
  %v697 = vpop.f32.mrb[0].mxu0
  %v698 = vpop.f32.mrb[0].mxu0
  %v699 = vadd.f32 %v645, %v698
  %v700 = vpop.f32.mrb[0].mxu0
  %701 = vdwg.mxu0
  %v702 = vadd.f32 %v91, %v696
  %v703 = vadd.f32 %v92, %v699
  %v704 = vsel %vm53, %v702, 0.0
  %705 = vadd.xlane.f32.xlu0 %v704
  %v706 = vpop.xlane.xlu0 %705
  %v707 = vsel %vm53, %v703, 0.0
  %708 = vadd.xlane.f32.xlu0 %v707
  %v709 = vpop.xlane.xlu0 %708
  %v710 = vmul.f32 %v706, %v60
  %v711 = vmul.f32 %v709, %v60
  %v712 = vsub.f32 %v702, %v710
  %v713 = vsub.f32 %v703, %v711
  %v714 = vmul.f32 %v712, %v712
  %v715 = vmul.f32 %v713, %v713
  %v716 = vsel %vm53, %v714, 0.0
  %717 = vadd.xlane.f32.xlu0 %v716
  %v718 = vpop.xlane.xlu0 %717
  %v719 = vsel %vm53, %v715, 0.0
  %720 = vadd.xlane.f32.xlu0 %v719
  %v721 = vpop.xlane.xlu0 %720
  %v722 = vmul.f32 %v718, %v60
  %v723 = vmul.f32 %v721, %v60
  %v724 = vadd.f32 %v722, 1e-12
  %v725 = vadd.f32 %v723, 1e-12
  %v726 = vrsqrt.pop %v724
  %v727 = vrsqrt.pop %v725
  %v728 = vmul.f32 %v712, %v726
  %v729 = vmul.f32 %v713, %v727
  %v730 = vlaneseq
  %v731 = vshrl.u32 %v730, 7
  %v732 = vsub.s32 1, %v731
  %v733 = vrot.slane %v636, %v732
  %v734 = vmul.f32 %v728, %v733
  %v735 = vmul.f32 %v729, %v733
  %v736 = vlaneseq
  %v737 = vshrl.u32 %v736, 7
  %v738 = vsub.s32 2, %v737
  %v739 = vrot.slane %v636, %v738
  %v740 = vadd.f32 %v734, %v739
  %v741 = vadd.f32 %v735, %v739
  %v742 = vld [vmem:[%s6] sm:$0xf]
  %v743 = vld [vmem:[%s6 + $0x4] sm:$0xf]
  %v744 = vld [vmem:[%s6 + $0x8] sm:$0xf]
  %v745 = vld [vmem:[%s6 + $0xc] sm:$0xf]
  %v746 = vpack.c.bf16 %v741, %v740
  %v747 = vld [vmem:[%s7] sm:$0x1]
  %v749 = vlaneseq
  %v750 = vshrl.u32 %v749, 7
  %v751 = vsub.s32 0, %v750
  %v752 = vrot.slane %v747, %v751
  %v758 = vunpack.c.l.b16 %v742
  %v759 = vunpack.c.l.b16 %v743
  %v760 = vunpack.c.l.b16 %v744
  %v761 = vunpack.c.l.b16 %v745
  %v762 = vpack.c.b16 %v759, %v758
  %v763 = vpack.c.b16 %v761, %v760
  %v767 = vsel %vm53, %v746, 0
  %769 = vmatprep.subr.bf16.mxu0 0
  %770 = vmatpush1.bf16.msra.mxu0 %v762
  %771 = vmatprep.subr.bf16.mxu0 0
  %772 = vmatpush1.bf16.msra.mxu0 %v763
  %773 = vmatprep.subr.bf16.mxu0 0
  %774 = vmatpush1.bf16.msra.mxu0 0
  %775 = vmatprep.subr.bf16.mxu0 0
  %776 = vmatpush1.bf16.msra.mxu0 0
  %777 = vmatprep.subr.bf16.mxu0 0
  %778 = vmatpush1.bf16.msra.mxu0 0
  %779 = vmatprep.subr.bf16.mxu0 0
  %780 = vmatpush1.bf16.msra.mxu0 0
  %781 = vmatprep.subr.bf16.mxu0 0
  %782 = vmatpush1.bf16.msra.mxu0 0
  %783 = vmatprep.subr.bf16.mxu0 0
  %784 = vmatpush1.bf16.msra.mxu0 0
  %785 = vmatprep.subr.bf16.mxu0 0
  %786 = vmatpush1.bf16.msra.mxu0 0
  %787 = vmatprep.subr.bf16.mxu0 0
  %788 = vmatpush1.bf16.msra.mxu0 0
  %789 = vmatprep.subr.bf16.mxu0 0
  %790 = vmatpush1.bf16.msra.mxu0 0
  %791 = vmatprep.subr.bf16.mxu0 0
  %792 = vmatpush1.bf16.msra.mxu0 0
  %793 = vmatprep.subr.bf16.mxu0 0
  %794 = vmatpush1.bf16.msra.mxu0 0
  %795 = vmatprep.subr.bf16.mxu0 0
  %796 = vmatpush1.bf16.msra.mxu0 0
  %797 = vmatprep.subr.bf16.mxu0 0
  %798 = vmatpush1.bf16.msra.mxu0 0
  %799 = vmatprep.subr.bf16.mxu0 0
  %800 = vmatpush1.bf16.msra.mxu0 0
  %801 = vmatprep.mubr.bf16.mxu0 0
  %802 = vmatmul.mubr.bf16.gmra.mrb[0].mxu0 %v767
  %v803 = vpop.f32.mrb[0].mxu0
  %v804 = vadd.f32 %v752, %v803
  %v805 = vpop.f32.mrb[0].mxu0
  %v806 = vpop.f32.mrb[0].mxu0
  %v807 = vadd.f32 %v752, %v806
  %v808 = vpop.f32.mrb[0].mxu0
  %809 = vdwg.mxu0
  %v810 = vmul.f32 %v804, 0.5
  %v811 = vmul.f32 %v807, 0.5
  %v812 = vmul.f32 %v804, 0.044715
  %v813 = vmul.f32 %v807, 0.044715
  %v814 = vmul.f32 %v812, %v804
  %v815 = vmul.f32 %v813, %v807
  %v816 = vmul.f32 %v814, %v804
  %v817 = vmul.f32 %v815, %v807
  %v818 = vadd.f32 %v804, %v816
  %v819 = vadd.f32 %v807, %v817
  %v820 = vmul.f32 %v818, 0.7978846
  %v821 = vmul.f32 %v819, 0.7978846
  %v822 = vtanh.pop %v820
  %v823 = vtanh.pop %v821
  %v824 = vadd.f32 %v822, 1.0
  %v825 = vadd.f32 %v823, 1.0
  %v826 = vmul.f32 %v810, %v824
  %v827 = vmul.f32 %v811, %v825
  %v828 = vld [vmem:[%s8] sm:$0xf]
  %v829 = vld [vmem:[%s8 + $0x4] sm:$0xf]
  %v830 = vld [vmem:[%s8 + $0x8] sm:$0xf]
  %v831 = vld [vmem:[%s8 + $0xc] sm:$0xf]
  %v832 = vld [vmem:[%s8 + $0x10] sm:$0xf]
  %v833 = vld [vmem:[%s8 + $0x14] sm:$0xf]
  %v834 = vld [vmem:[%s8 + $0x18] sm:$0xf]
  %v835 = vld [vmem:[%s8 + $0x1c] sm:$0xf]
  %v836 = vpack.c.bf16 %v827, %v826
  %v837 = vlaneseq
  %v838 = vshrl.u32 %v837, 7
  %v839 = vsub.s32 3, %v838
  %v840 = vrot.slane %v636, %v839
  %v849 = vunpack.c.l.b16 %v828
  %v850 = vunpack.c.l.b16 %v829
  %v851 = vunpack.c.l.b16 %v830
  %v852 = vunpack.c.l.b16 %v831
  %v853 = vunpack.c.l.b16 %v832
  %v854 = vunpack.c.l.b16 %v833
  %v855 = vunpack.c.l.b16 %v834
  %v856 = vunpack.c.l.b16 %v835
  %v857 = vpack.c.b16 %v850, %v849
  %v858 = vpack.c.b16 %v852, %v851
  %v859 = vpack.c.b16 %v854, %v853
  %v860 = vpack.c.b16 %v856, %v855
  %vm865 = vcmask 523264
  %v867 = vsel %vm865, %v836, 0
  %869 = vmatprep.subr.bf16.mxu0 0
  %870 = vmatpush1.bf16.msra.mxu0 %v857
  %871 = vmatprep.subr.bf16.mxu0 0
  %872 = vmatpush1.bf16.msra.mxu0 %v858
  %873 = vmatprep.subr.bf16.mxu0 0
  %874 = vmatpush1.bf16.msra.mxu0 %v859
  %875 = vmatprep.subr.bf16.mxu0 0
  %876 = vmatpush1.bf16.msra.mxu0 %v860
  %877 = vmatprep.subr.bf16.mxu0 0
  %878 = vmatpush1.bf16.msra.mxu0 0
  %879 = vmatprep.subr.bf16.mxu0 0
  %880 = vmatpush1.bf16.msra.mxu0 0
  %881 = vmatprep.subr.bf16.mxu0 0
  %882 = vmatpush1.bf16.msra.mxu0 0
  %883 = vmatprep.subr.bf16.mxu0 0
  %884 = vmatpush1.bf16.msra.mxu0 0
  %885 = vmatprep.subr.bf16.mxu0 0
  %886 = vmatpush1.bf16.msra.mxu0 0
  %887 = vmatprep.subr.bf16.mxu0 0
  %888 = vmatpush1.bf16.msra.mxu0 0
  %889 = vmatprep.subr.bf16.mxu0 0
  %890 = vmatpush1.bf16.msra.mxu0 0
  %891 = vmatprep.subr.bf16.mxu0 0
  %892 = vmatpush1.bf16.msra.mxu0 0
  %893 = vmatprep.subr.bf16.mxu0 0
  %894 = vmatpush1.bf16.msra.mxu0 0
  %895 = vmatprep.subr.bf16.mxu0 0
  %896 = vmatpush1.bf16.msra.mxu0 0
  %897 = vmatprep.subr.bf16.mxu0 0
  %898 = vmatpush1.bf16.msra.mxu0 0
  %899 = vmatprep.subr.bf16.mxu0 0
  %900 = vmatpush1.bf16.msra.mxu0 0
  %901 = vmatprep.mubr.bf16.mxu0 0
  %902 = vmatmul.mubr.bf16.gmra.mrb[0].mxu0 %v867
  %v903 = vpop.f32.mrb[0].mxu0
  %v904 = vadd.f32 %v840, %v903
  %v905 = vpop.f32.mrb[0].mxu0
  %v906 = vpop.f32.mrb[0].mxu0
  %v907 = vadd.f32 %v840, %v906
  %v908 = vpop.f32.mrb[0].mxu0
  %909 = vdwg.mxu0
  %v910 = vadd.f32 %v740, %v904
  %v911 = vadd.f32 %v741, %v907
  %v912 = vsel %vm53, %v910, 0.0
  %913 = vadd.xlane.f32.xlu0 %v912
  %v914 = vpop.xlane.xlu0 %913
  %v915 = vsel %vm53, %v911, 0.0
  %916 = vadd.xlane.f32.xlu0 %v915
  %v917 = vpop.xlane.xlu0 %916
  %v918 = vmul.f32 %v914, %v60
  %v919 = vmul.f32 %v917, %v60
  %v920 = vsub.f32 %v910, %v918
  %v921 = vsub.f32 %v911, %v919
  %v922 = vmul.f32 %v920, %v920
  %v923 = vmul.f32 %v921, %v921
  %v924 = vsel %vm53, %v922, 0.0
  %925 = vadd.xlane.f32.xlu0 %v924
  %v926 = vpop.xlane.xlu0 %925
  %v927 = vsel %vm53, %v923, 0.0
  %928 = vadd.xlane.f32.xlu0 %v927
  %v929 = vpop.xlane.xlu0 %928
  %v930 = vmul.f32 %v926, %v60
  %v931 = vmul.f32 %v929, %v60
  %v932 = vadd.f32 %v930, 1e-12
  %v933 = vadd.f32 %v931, 1e-12
  %v934 = vrsqrt.pop %v932
  %v935 = vrsqrt.pop %v933
  %v936 = vmul.f32 %v920, %v934
  %v937 = vmul.f32 %v921, %v935
  %v938 = vlaneseq
  %v939 = vshrl.u32 %v938, 7
  %v940 = vsub.s32 4, %v939
  %v941 = vrot.slane %v636, %v940
  %v942 = vmul.f32 %v936, %v941
  %v943 = vmul.f32 %v937, %v941
  %v944 = vlaneseq
  %v945 = vshrl.u32 %v944, 7
  %v946 = vsub.s32 5, %v945
  %v947 = vrot.slane %v636, %v946
  %v948 = vadd.f32 %v942, %v947
  %v949 = vadd.f32 %v943, %v947
  %s950 = scalar_lea.vmem %s3, 16
  %v951 = vld [vmem:[%s950] sm:$0xf]
  %v952 = vld [vmem:[%s950 + $0x4] sm:$0xf]
  %v953 = vld [vmem:[%s950 + $0x8] sm:$0xf]
  %v954 = vld [vmem:[%s950 + $0xc] sm:$0xf]
  %v955 = vpack.c.bf16 %v949, %v948
  %s956 = scalar_lea.vmem %s4, 1
  %v957 = vld [vmem:[%s956] sm:$0x1]
  %v959 = vlaneseq
  %v960 = vshrl.u32 %v959, 7
  %v961 = vsub.s32 0, %v960
  %v962 = vrot.slane %v957, %v961
  %v968 = vunpack.c.l.b16 %v951
  %v969 = vunpack.c.l.b16 %v952
  %v970 = vunpack.c.l.b16 %v953
  %v971 = vunpack.c.l.b16 %v954
  %v972 = vpack.c.b16 %v969, %v968
  %v973 = vpack.c.b16 %v971, %v970
  %v977 = vsel %vm53, %v955, 0
  %979 = vmatprep.subr.bf16.mxu0 0
  %980 = vmatpush1.bf16.msra.mxu0 %v972
  %981 = vmatprep.subr.bf16.mxu0 0
  %982 = vmatpush1.bf16.msra.mxu0 %v973
  %983 = vmatprep.subr.bf16.mxu0 0
  %984 = vmatpush1.bf16.msra.mxu0 0
  %985 = vmatprep.subr.bf16.mxu0 0
  %986 = vmatpush1.bf16.msra.mxu0 0
  %987 = vmatprep.subr.bf16.mxu0 0
  %988 = vmatpush1.bf16.msra.mxu0 0
  %989 = vmatprep.subr.bf16.mxu0 0
  %990 = vmatpush1.bf16.msra.mxu0 0
  %991 = vmatprep.subr.bf16.mxu0 0
  %992 = vmatpush1.bf16.msra.mxu0 0
  %993 = vmatprep.subr.bf16.mxu0 0
  %994 = vmatpush1.bf16.msra.mxu0 0
  %995 = vmatprep.subr.bf16.mxu0 0
  %996 = vmatpush1.bf16.msra.mxu0 0
  %997 = vmatprep.subr.bf16.mxu0 0
  %998 = vmatpush1.bf16.msra.mxu0 0
  %999 = vmatprep.subr.bf16.mxu0 0
  %1000 = vmatpush1.bf16.msra.mxu0 0
  %1001 = vmatprep.subr.bf16.mxu0 0
  %1002 = vmatpush1.bf16.msra.mxu0 0
  %1003 = vmatprep.subr.bf16.mxu0 0
  %1004 = vmatpush1.bf16.msra.mxu0 0
  %1005 = vmatprep.subr.bf16.mxu0 0
  %1006 = vmatpush1.bf16.msra.mxu0 0
  %1007 = vmatprep.subr.bf16.mxu0 0
  %1008 = vmatpush1.bf16.msra.mxu0 0
  %1009 = vmatprep.subr.bf16.mxu0 0
  %1010 = vmatpush1.bf16.msra.mxu0 0
  %1011 = vmatprep.mubr.bf16.mxu0 0
  %1012 = vmatmul.mubr.bf16.gmra.mrb[0].mxu0 %v977
  %v1013 = vpop.f32.mrb[0].mxu0
  %v1014 = vadd.f32 %v962, %v1013
  %v1015 = vpop.f32.mrb[0].mxu0
  %v1016 = vpop.f32.mrb[0].mxu0
  %v1017 = vadd.f32 %v962, %v1016
  %v1018 = vpop.f32.mrb[0].mxu0
  %1019 = vdwg.mxu0
  %v1020 = vpack.c.bf16 %v1014, %v1014
  %v1021 = vpack.c.bf16 %v1017, %v1017
  %1023 = vrot.lane.b32.xlu0 %v1020, 96
  %v1024 = vpop.permute.xlu0 %1023
  %v1026 = vsel %vm168, %v1020, 0
  %v1029 = vsel %vm168, %v1024, 0
  %1031 = vmatprep.subr.bf16.mxu0 0
  %1032 = vmatpush1.bf16.xpose.msra.mxu0 %v1029
  %1033 = vmatprep.subr.bf16.mxu0 0
  %1034 = vmatpush1.bf16.xpose.msra.mxu0 0
  %1035 = vmatprep.subr.bf16.mxu0 0
  %1036 = vmatpush1.bf16.xpose.msra.mxu0 0
  %1037 = vmatprep.subr.bf16.mxu0 0
  %1038 = vmatpush1.bf16.xpose.msra.mxu0 0
  %1039 = vmatprep.subr.bf16.mxu0 0
  %1040 = vmatpush1.bf16.xpose.msra.mxu0 0
  %1041 = vmatprep.subr.bf16.mxu0 0
  %1042 = vmatpush1.bf16.xpose.msra.mxu0 0
  %1043 = vmatprep.subr.bf16.mxu0 0
  %1044 = vmatpush1.bf16.xpose.msra.mxu0 0
  %1045 = vmatprep.subr.bf16.mxu0 0
  %1046 = vmatpush1.bf16.xpose.msra.mxu0 0
  %1047 = vmatprep.subr.bf16.mxu0 0
  %1048 = vmatpush1.bf16.xpose.msra.mxu0 0
  %1049 = vmatprep.subr.bf16.mxu0 0
  %1050 = vmatpush1.bf16.xpose.msra.mxu0 0
  %1051 = vmatprep.subr.bf16.mxu0 0
  %1052 = vmatpush1.bf16.xpose.msra.mxu0 0
  %1053 = vmatprep.subr.bf16.mxu0 0
  %1054 = vmatpush1.bf16.xpose.msra.mxu0 0
  %1055 = vmatprep.subr.bf16.mxu0 0
  %1056 = vmatpush1.bf16.xpose.msra.mxu0 0
  %1057 = vmatprep.subr.bf16.mxu0 0
  %1058 = vmatpush1.bf16.xpose.msra.mxu0 0
  %1059 = vmatprep.subr.bf16.mxu0 0
  %1060 = vmatpush1.bf16.xpose.msra.mxu0 0
  %1061 = vmatprep.subr.bf16.mxu0 0
  %1062 = vmatpush1.bf16.xpose.msra.mxu0 0
  %1063 = vmatprep.mubr.bf16.mxu0 0
  %1064 = vmatmul.mubr.bf16.gmra.mrb[0].mxu0 %v1026
  %v1065 = vpop.f32.mrb[0].mxu0
  %v1066 = vadd.f32 0.0, %v1065
  %v1067 = vpop.f32.mrb[0].mxu0
  %v1068 = vpop.f32.mrb[0].mxu0
  %v1069 = vpop.f32.mrb[0].mxu0
  %1070 = vdwg.mxu0
  %1072 = vrot.lane.b32.xlu0 %v1021, 96
  %v1073 = vpop.permute.xlu0 %1072
  %v1075 = vsel %vm168, %v1021, 0
  %v1078 = vsel %vm168, %v1073, 0
  %1080 = vmatprep.subr.bf16.mxu0 0
  %1081 = vmatpush1.bf16.xpose.msra.mxu0 %v1078
  %1082 = vmatprep.subr.bf16.mxu0 0
  %1083 = vmatpush1.bf16.xpose.msra.mxu0 0
  %1084 = vmatprep.subr.bf16.mxu0 0
  %1085 = vmatpush1.bf16.xpose.msra.mxu0 0
  %1086 = vmatprep.subr.bf16.mxu0 0
  %1087 = vmatpush1.bf16.xpose.msra.mxu0 0
  %1088 = vmatprep.subr.bf16.mxu0 0
  %1089 = vmatpush1.bf16.xpose.msra.mxu0 0
  %1090 = vmatprep.subr.bf16.mxu0 0
  %1091 = vmatpush1.bf16.xpose.msra.mxu0 0
  %1092 = vmatprep.subr.bf16.mxu0 0
  %1093 = vmatpush1.bf16.xpose.msra.mxu0 0
  %1094 = vmatprep.subr.bf16.mxu0 0
  %1095 = vmatpush1.bf16.xpose.msra.mxu0 0
  %1096 = vmatprep.subr.bf16.mxu0 0
  %1097 = vmatpush1.bf16.xpose.msra.mxu0 0
  %1098 = vmatprep.subr.bf16.mxu0 0
  %1099 = vmatpush1.bf16.xpose.msra.mxu0 0
  %1100 = vmatprep.subr.bf16.mxu0 0
  %1101 = vmatpush1.bf16.xpose.msra.mxu0 0
  %1102 = vmatprep.subr.bf16.mxu0 0
  %1103 = vmatpush1.bf16.xpose.msra.mxu0 0
  %1104 = vmatprep.subr.bf16.mxu0 0
  %1105 = vmatpush1.bf16.xpose.msra.mxu0 0
  %1106 = vmatprep.subr.bf16.mxu0 0
  %1107 = vmatpush1.bf16.xpose.msra.mxu0 0
  %1108 = vmatprep.subr.bf16.mxu0 0
  %1109 = vmatpush1.bf16.xpose.msra.mxu0 0
  %1110 = vmatprep.subr.bf16.mxu0 0
  %1111 = vmatpush1.bf16.xpose.msra.mxu0 0
  %1112 = vmatprep.mubr.bf16.mxu0 0
  %1113 = vmatmul.mubr.bf16.gmra.mrb[0].mxu0 %v1075
  %v1114 = vpop.f32.mrb[0].mxu0
  %v1115 = vadd.f32 0.0, %v1114
  %v1116 = vpop.f32.mrb[0].mxu0
  %v1117 = vpop.f32.mrb[0].mxu0
  %v1118 = vpop.f32.mrb[0].mxu0
  %1119 = vdwg.mxu0
  %v1120 = vmul.f32 %v1066, 0.25
  %v1121 = vmul.f32 %v1115, 0.25
  %v1122 = vadd.f32 %v1120, %v271
  %v1123 = vadd.f32 %v1121, %v275
  %v1124 = vsel %vm280, %v1122, -inf
  %1125 = vmax.xlane.f32.xlu0 %v1124
  %v1126 = vpop.xlane.xlu0 %1125
  %v1127 = vsel %vm280, %v1123, -inf
  %1128 = vmax.xlane.f32.xlu0 %v1127
  %v1129 = vpop.xlane.xlu0 %1128
  %v1130 = vsub.f32 %v1122, %v1126
  %v1131 = vsub.f32 %v1123, %v1129
  %v1132 = vmul.f32 %v1130, 1.442695
  %v1133 = vpow.pop %v1132
  %v1134 = vmul.f32 %v1131, 1.442695
  %v1135 = vpow.pop %v1134
  %v1136 = vsel %vm280, %v1133, 0.0
  %1137 = vadd.xlane.f32.xlu0 %v1136
  %v1138 = vpop.xlane.xlu0 %1137
  %v1139 = vsel %vm280, %v1135, 0.0
  %1140 = vadd.xlane.f32.xlu0 %v1139
  %v1141 = vpop.xlane.xlu0 %1140
  %v1142 = vrcp.pop %v1138
  %v1143 = vrcp.pop %v1141
  %v1144 = vmul.f32 %v1133, %v1142
  %v1145 = vmul.f32 %v1135, %v1143
  %v1146 = vpack.c.bf16 %v1144, %v1144
  %v1147 = vpack.c.bf16 %v1145, %v1145
  %1148 = vrot.lane.b32.xlu0 %v1020, 64
  %v1149 = vpop.permute.xlu0 %1148
  %v1151 = vsel %vm280, %v1146, 0
  %v1154 = vsel %vm310, %v1149, 0
  %1156 = vmatprep.subr.bf16.mxu0 0
  %1157 = vmatpush1.bf16.msra.mxu0 %v1154
  %1158 = vmatprep.subr.bf16.mxu0 0
  %1159 = vmatpush1.bf16.msra.mxu0 0
  %1160 = vmatprep.subr.bf16.mxu0 0
  %1161 = vmatpush1.bf16.msra.mxu0 0
  %1162 = vmatprep.subr.bf16.mxu0 0
  %1163 = vmatpush1.bf16.msra.mxu0 0
  %1164 = vmatprep.subr.bf16.mxu0 0
  %1165 = vmatpush1.bf16.msra.mxu0 0
  %1166 = vmatprep.subr.bf16.mxu0 0
  %1167 = vmatpush1.bf16.msra.mxu0 0
  %1168 = vmatprep.subr.bf16.mxu0 0
  %1169 = vmatpush1.bf16.msra.mxu0 0
  %1170 = vmatprep.subr.bf16.mxu0 0
  %1171 = vmatpush1.bf16.msra.mxu0 0
  %1172 = vmatprep.subr.bf16.mxu0 0
  %1173 = vmatpush1.bf16.msra.mxu0 0
  %1174 = vmatprep.subr.bf16.mxu0 0
  %1175 = vmatpush1.bf16.msra.mxu0 0
  %1176 = vmatprep.subr.bf16.mxu0 0
  %1177 = vmatpush1.bf16.msra.mxu0 0
  %1178 = vmatprep.subr.bf16.mxu0 0
  %1179 = vmatpush1.bf16.msra.mxu0 0
  %1180 = vmatprep.subr.bf16.mxu0 0
  %1181 = vmatpush1.bf16.msra.mxu0 0
  %1182 = vmatprep.subr.bf16.mxu0 0
  %1183 = vmatpush1.bf16.msra.mxu0 0
  %1184 = vmatprep.subr.bf16.mxu0 0
  %1185 = vmatpush1.bf16.msra.mxu0 0
  %1186 = vmatprep.subr.bf16.mxu0 0
  %1187 = vmatpush1.bf16.msra.mxu0 0
  %1188 = vmatprep.mubr.bf16.mxu0 0
  %1189 = vmatmul.mubr.bf16.gmra.mrb[0].mxu0 %v1151
  %v1190 = vpop.f32.mrb[0].mxu0
  %v1191 = vadd.f32 0.0, %v1190
  %v1192 = vpop.f32.mrb[0].mxu0
  %v1193 = vpop.f32.mrb[0].mxu0
  %v1194 = vpop.f32.mrb[0].mxu0
  %1195 = vdwg.mxu0
  %1196 = vrot.lane.b32.xlu0 %v1021, 64
  %v1197 = vpop.permute.xlu0 %1196
  %v1199 = vsel %vm280, %v1147, 0
  %v1202 = vsel %vm310, %v1197, 0
  %1204 = vmatprep.subr.bf16.mxu0 0
  %1205 = vmatpush1.bf16.msra.mxu0 %v1202
  %1206 = vmatprep.subr.bf16.mxu0 0
  %1207 = vmatpush1.bf16.msra.mxu0 0
  %1208 = vmatprep.subr.bf16.mxu0 0
  %1209 = vmatpush1.bf16.msra.mxu0 0
  %1210 = vmatprep.subr.bf16.mxu0 0
  %1211 = vmatpush1.bf16.msra.mxu0 0
  %1212 = vmatprep.subr.bf16.mxu0 0
  %1213 = vmatpush1.bf16.msra.mxu0 0
  %1214 = vmatprep.subr.bf16.mxu0 0
  %1215 = vmatpush1.bf16.msra.mxu0 0
  %1216 = vmatprep.subr.bf16.mxu0 0
  %1217 = vmatpush1.bf16.msra.mxu0 0
  %1218 = vmatprep.subr.bf16.mxu0 0
  %1219 = vmatpush1.bf16.msra.mxu0 0
  %1220 = vmatprep.subr.bf16.mxu0 0
  %1221 = vmatpush1.bf16.msra.mxu0 0
  %1222 = vmatprep.subr.bf16.mxu0 0
  %1223 = vmatpush1.bf16.msra.mxu0 0
  %1224 = vmatprep.subr.bf16.mxu0 0
  %1225 = vmatpush1.bf16.msra.mxu0 0
  %1226 = vmatprep.subr.bf16.mxu0 0
  %1227 = vmatpush1.bf16.msra.mxu0 0
  %1228 = vmatprep.subr.bf16.mxu0 0
  %1229 = vmatpush1.bf16.msra.mxu0 0
  %1230 = vmatprep.subr.bf16.mxu0 0
  %1231 = vmatpush1.bf16.msra.mxu0 0
  %1232 = vmatprep.subr.bf16.mxu0 0
  %1233 = vmatpush1.bf16.msra.mxu0 0
  %1234 = vmatprep.subr.bf16.mxu0 0
  %1235 = vmatpush1.bf16.msra.mxu0 0
  %1236 = vmatprep.mubr.bf16.mxu0 0
  %1237 = vmatmul.mubr.bf16.gmra.mrb[0].mxu0 %v1199
  %v1238 = vpop.f32.mrb[0].mxu0
  %v1239 = vadd.f32 0.0, %v1238
  %v1240 = vpop.f32.mrb[0].mxu0
  %v1241 = vpop.f32.mrb[0].mxu0
  %v1242 = vpop.f32.mrb[0].mxu0
  %1243 = vdwg.mxu0
  %1244 = vrot.lane.b32.xlu0 %v1020, 112
  %v1245 = vpop.permute.xlu0 %1244
  %1246 = vrot.lane.b32.xlu0 %v1020, 80
  %v1247 = vpop.permute.xlu0 %1246
  %v1249 = vsel %vm168, %v1245, 0
  %v1252 = vsel %vm168, %v1247, 0
  %1254 = vmatprep.subr.bf16.mxu0 0
  %1255 = vmatpush1.bf16.xpose.msra.mxu0 %v1252
  %1256 = vmatprep.subr.bf16.mxu0 0
  %1257 = vmatpush1.bf16.xpose.msra.mxu0 0
  %1258 = vmatprep.subr.bf16.mxu0 0
  %1259 = vmatpush1.bf16.xpose.msra.mxu0 0
  %1260 = vmatprep.subr.bf16.mxu0 0
  %1261 = vmatpush1.bf16.xpose.msra.mxu0 0
  %1262 = vmatprep.subr.bf16.mxu0 0
  %1263 = vmatpush1.bf16.xpose.msra.mxu0 0
  %1264 = vmatprep.subr.bf16.mxu0 0
  %1265 = vmatpush1.bf16.xpose.msra.mxu0 0
  %1266 = vmatprep.subr.bf16.mxu0 0
  %1267 = vmatpush1.bf16.xpose.msra.mxu0 0
  %1268 = vmatprep.subr.bf16.mxu0 0
  %1269 = vmatpush1.bf16.xpose.msra.mxu0 0
  %1270 = vmatprep.subr.bf16.mxu0 0
  %1271 = vmatpush1.bf16.xpose.msra.mxu0 0
  %1272 = vmatprep.subr.bf16.mxu0 0
  %1273 = vmatpush1.bf16.xpose.msra.mxu0 0
  %1274 = vmatprep.subr.bf16.mxu0 0
  %1275 = vmatpush1.bf16.xpose.msra.mxu0 0
  %1276 = vmatprep.subr.bf16.mxu0 0
  %1277 = vmatpush1.bf16.xpose.msra.mxu0 0
  %1278 = vmatprep.subr.bf16.mxu0 0
  %1279 = vmatpush1.bf16.xpose.msra.mxu0 0
  %1280 = vmatprep.subr.bf16.mxu0 0
  %1281 = vmatpush1.bf16.xpose.msra.mxu0 0
  %1282 = vmatprep.subr.bf16.mxu0 0
  %1283 = vmatpush1.bf16.xpose.msra.mxu0 0
  %1284 = vmatprep.subr.bf16.mxu0 0
  %1285 = vmatpush1.bf16.xpose.msra.mxu0 0
  %1286 = vmatprep.mubr.bf16.mxu0 0
  %1287 = vmatmul.mubr.bf16.gmra.mrb[0].mxu0 %v1249
  %v1288 = vpop.f32.mrb[0].mxu0
  %v1289 = vadd.f32 0.0, %v1288
  %v1290 = vpop.f32.mrb[0].mxu0
  %v1291 = vpop.f32.mrb[0].mxu0
  %v1292 = vpop.f32.mrb[0].mxu0
  %1293 = vdwg.mxu0
  %1294 = vrot.lane.b32.xlu0 %v1021, 112
  %v1295 = vpop.permute.xlu0 %1294
  %1296 = vrot.lane.b32.xlu0 %v1021, 80
  %v1297 = vpop.permute.xlu0 %1296
  %v1299 = vsel %vm168, %v1295, 0
  %v1302 = vsel %vm168, %v1297, 0
  %1304 = vmatprep.subr.bf16.mxu0 0
  %1305 = vmatpush1.bf16.xpose.msra.mxu0 %v1302
  %1306 = vmatprep.subr.bf16.mxu0 0
  %1307 = vmatpush1.bf16.xpose.msra.mxu0 0
  %1308 = vmatprep.subr.bf16.mxu0 0
  %1309 = vmatpush1.bf16.xpose.msra.mxu0 0
  %1310 = vmatprep.subr.bf16.mxu0 0
  %1311 = vmatpush1.bf16.xpose.msra.mxu0 0
  %1312 = vmatprep.subr.bf16.mxu0 0
  %1313 = vmatpush1.bf16.xpose.msra.mxu0 0
  %1314 = vmatprep.subr.bf16.mxu0 0
  %1315 = vmatpush1.bf16.xpose.msra.mxu0 0
  %1316 = vmatprep.subr.bf16.mxu0 0
  %1317 = vmatpush1.bf16.xpose.msra.mxu0 0
  %1318 = vmatprep.subr.bf16.mxu0 0
  %1319 = vmatpush1.bf16.xpose.msra.mxu0 0
  %1320 = vmatprep.subr.bf16.mxu0 0
  %1321 = vmatpush1.bf16.xpose.msra.mxu0 0
  %1322 = vmatprep.subr.bf16.mxu0 0
  %1323 = vmatpush1.bf16.xpose.msra.mxu0 0
  %1324 = vmatprep.subr.bf16.mxu0 0
  %1325 = vmatpush1.bf16.xpose.msra.mxu0 0
  %1326 = vmatprep.subr.bf16.mxu0 0
  %1327 = vmatpush1.bf16.xpose.msra.mxu0 0
  %1328 = vmatprep.subr.bf16.mxu0 0
  %1329 = vmatpush1.bf16.xpose.msra.mxu0 0
  %1330 = vmatprep.subr.bf16.mxu0 0
  %1331 = vmatpush1.bf16.xpose.msra.mxu0 0
  %1332 = vmatprep.subr.bf16.mxu0 0
  %1333 = vmatpush1.bf16.xpose.msra.mxu0 0
  %1334 = vmatprep.subr.bf16.mxu0 0
  %1335 = vmatpush1.bf16.xpose.msra.mxu0 0
  %1336 = vmatprep.mubr.bf16.mxu0 0
  %1337 = vmatmul.mubr.bf16.gmra.mrb[0].mxu0 %v1299
  %v1338 = vpop.f32.mrb[0].mxu0
  %v1339 = vadd.f32 0.0, %v1338
  %v1340 = vpop.f32.mrb[0].mxu0
  %v1341 = vpop.f32.mrb[0].mxu0
  %v1342 = vpop.f32.mrb[0].mxu0
  %1343 = vdwg.mxu0
  %v1344 = vmul.f32 %v1289, 0.25
  %v1345 = vmul.f32 %v1339, 0.25
  %v1346 = vadd.f32 %v1344, %v271
  %v1347 = vadd.f32 %v1345, %v275
  %v1348 = vsel %vm280, %v1346, -inf
  %1349 = vmax.xlane.f32.xlu0 %v1348
  %v1350 = vpop.xlane.xlu0 %1349
  %v1351 = vsel %vm280, %v1347, -inf
  %1352 = vmax.xlane.f32.xlu0 %v1351
  %v1353 = vpop.xlane.xlu0 %1352
  %v1354 = vsub.f32 %v1346, %v1350
  %v1355 = vsub.f32 %v1347, %v1353
  %v1356 = vmul.f32 %v1354, 1.442695
  %v1357 = vpow.pop %v1356
  %v1358 = vmul.f32 %v1355, 1.442695
  %v1359 = vpow.pop %v1358
  %v1360 = vsel %vm280, %v1357, 0.0
  %1361 = vadd.xlane.f32.xlu0 %v1360
  %v1362 = vpop.xlane.xlu0 %1361
  %v1363 = vsel %vm280, %v1359, 0.0
  %1364 = vadd.xlane.f32.xlu0 %v1363
  %v1365 = vpop.xlane.xlu0 %1364
  %v1366 = vrcp.pop %v1362
  %v1367 = vrcp.pop %v1365
  %v1368 = vmul.f32 %v1357, %v1366
  %v1369 = vmul.f32 %v1359, %v1367
  %v1370 = vpack.c.bf16 %v1368, %v1368
  %v1371 = vpack.c.bf16 %v1369, %v1369
  %1372 = vrot.lane.b32.xlu0 %v1020, 48
  %v1373 = vpop.permute.xlu0 %1372
  %v1375 = vsel %vm280, %v1370, 0
  %v1378 = vsel %vm310, %v1373, 0
  %1380 = vmatprep.subr.bf16.mxu0 0
  %1381 = vmatpush1.bf16.msra.mxu0 %v1378
  %1382 = vmatprep.subr.bf16.mxu0 0
  %1383 = vmatpush1.bf16.msra.mxu0 0
  %1384 = vmatprep.subr.bf16.mxu0 0
  %1385 = vmatpush1.bf16.msra.mxu0 0
  %1386 = vmatprep.subr.bf16.mxu0 0
  %1387 = vmatpush1.bf16.msra.mxu0 0
  %1388 = vmatprep.subr.bf16.mxu0 0
  %1389 = vmatpush1.bf16.msra.mxu0 0
  %1390 = vmatprep.subr.bf16.mxu0 0
  %1391 = vmatpush1.bf16.msra.mxu0 0
  %1392 = vmatprep.subr.bf16.mxu0 0
  %1393 = vmatpush1.bf16.msra.mxu0 0
  %1394 = vmatprep.subr.bf16.mxu0 0
  %1395 = vmatpush1.bf16.msra.mxu0 0
  %1396 = vmatprep.subr.bf16.mxu0 0
  %1397 = vmatpush1.bf16.msra.mxu0 0
  %1398 = vmatprep.subr.bf16.mxu0 0
  %1399 = vmatpush1.bf16.msra.mxu0 0
  %1400 = vmatprep.subr.bf16.mxu0 0
  %1401 = vmatpush1.bf16.msra.mxu0 0
  %1402 = vmatprep.subr.bf16.mxu0 0
  %1403 = vmatpush1.bf16.msra.mxu0 0
  %1404 = vmatprep.subr.bf16.mxu0 0
  %1405 = vmatpush1.bf16.msra.mxu0 0
  %1406 = vmatprep.subr.bf16.mxu0 0
  %1407 = vmatpush1.bf16.msra.mxu0 0
  %1408 = vmatprep.subr.bf16.mxu0 0
  %1409 = vmatpush1.bf16.msra.mxu0 0
  %1410 = vmatprep.subr.bf16.mxu0 0
  %1411 = vmatpush1.bf16.msra.mxu0 0
  %1412 = vmatprep.mubr.bf16.mxu0 0
  %1413 = vmatmul.mubr.bf16.gmra.mrb[0].mxu0 %v1375
  %v1414 = vpop.f32.mrb[0].mxu0
  %v1415 = vadd.f32 0.0, %v1414
  %v1416 = vpop.f32.mrb[0].mxu0
  %v1417 = vpop.f32.mrb[0].mxu0
  %v1418 = vpop.f32.mrb[0].mxu0
  %1419 = vdwg.mxu0
  %1420 = vrot.lane.b32.xlu0 %v1021, 48
  %v1421 = vpop.permute.xlu0 %1420
  %v1423 = vsel %vm280, %v1371, 0
  %v1426 = vsel %vm310, %v1421, 0
  %1428 = vmatprep.subr.bf16.mxu0 0
  %1429 = vmatpush1.bf16.msra.mxu0 %v1426
  %1430 = vmatprep.subr.bf16.mxu0 0
  %1431 = vmatpush1.bf16.msra.mxu0 0
  %1432 = vmatprep.subr.bf16.mxu0 0
  %1433 = vmatpush1.bf16.msra.mxu0 0
  %1434 = vmatprep.subr.bf16.mxu0 0
  %1435 = vmatpush1.bf16.msra.mxu0 0
  %1436 = vmatprep.subr.bf16.mxu0 0
  %1437 = vmatpush1.bf16.msra.mxu0 0
  %1438 = vmatprep.subr.bf16.mxu0 0
  %1439 = vmatpush1.bf16.msra.mxu0 0
  %1440 = vmatprep.subr.bf16.mxu0 0
  %1441 = vmatpush1.bf16.msra.mxu0 0
  %1442 = vmatprep.subr.bf16.mxu0 0
  %1443 = vmatpush1.bf16.msra.mxu0 0
  %1444 = vmatprep.subr.bf16.mxu0 0
  %1445 = vmatpush1.bf16.msra.mxu0 0
  %1446 = vmatprep.subr.bf16.mxu0 0
  %1447 = vmatpush1.bf16.msra.mxu0 0
  %1448 = vmatprep.subr.bf16.mxu0 0
  %1449 = vmatpush1.bf16.msra.mxu0 0
  %1450 = vmatprep.subr.bf16.mxu0 0
  %1451 = vmatpush1.bf16.msra.mxu0 0
  %1452 = vmatprep.subr.bf16.mxu0 0
  %1453 = vmatpush1.bf16.msra.mxu0 0
  %1454 = vmatprep.subr.bf16.mxu0 0
  %1455 = vmatpush1.bf16.msra.mxu0 0
  %1456 = vmatprep.subr.bf16.mxu0 0
  %1457 = vmatpush1.bf16.msra.mxu0 0
  %1458 = vmatprep.subr.bf16.mxu0 0
  %1459 = vmatpush1.bf16.msra.mxu0 0
  %1460 = vmatprep.mubr.bf16.mxu0 0
  %1461 = vmatmul.mubr.bf16.gmra.mrb[0].mxu0 %v1423
  %v1462 = vpop.f32.mrb[0].mxu0
  %v1463 = vadd.f32 0.0, %v1462
  %v1464 = vpop.f32.mrb[0].mxu0
  %v1465 = vpop.f32.mrb[0].mxu0
  %v1466 = vpop.f32.mrb[0].mxu0
  %1467 = vdwg.mxu0
  %1470 = vrot.lane.b32.xlu0 %v1415, 16
  %v1471 = vpop.permute.xlu0 %1470
  %1472 = vrot.lane.b32.xlu0 %v1463, 16
  %v1473 = vpop.permute.xlu0 %1472
  %v1476 = vsel %vm168, %v1191, %v1471
  %v1477 = vsel %vm168, %v1239, %v1473
  %s1478 = scalar_lea.vmem %s9, 8
  %v1479 = vld [vmem:[%s1478] sm:$0x3f]
  %s1480 = scalar_lea.vmem %s5, 16
  %v1481 = vld [vmem:[%s1480] sm:$0xf]
  %v1482 = vld [vmem:[%s1480 + $0x4] sm:$0xf]
  %v1483 = vld [vmem:[%s1480 + $0x8] sm:$0xf]
  %v1484 = vld [vmem:[%s1480 + $0xc] sm:$0xf]
  %v1485 = vpack.c.bf16 %v1477, %v1476
  %v1486 = vlaneseq
  %v1487 = vshrl.u32 %v1486, 7
  %v1488 = vsub.s32 0, %v1487
  %v1489 = vrot.slane %v1479, %v1488
  %v1494 = vunpack.c.l.b16 %v1481
  %v1495 = vunpack.c.l.b16 %v1482
  %v1496 = vunpack.c.l.b16 %v1483
  %v1497 = vunpack.c.l.b16 %v1484
  %v1498 = vpack.c.b16 %v1495, %v1494
  %v1499 = vpack.c.b16 %v1497, %v1496
  %v1503 = vsel %vm53, %v1485, 0
  %1505 = vmatprep.subr.bf16.mxu0 0
  %1506 = vmatpush1.bf16.msra.mxu0 %v1498
  %1507 = vmatprep.subr.bf16.mxu0 0
  %1508 = vmatpush1.bf16.msra.mxu0 %v1499
  %1509 = vmatprep.subr.bf16.mxu0 0
  %1510 = vmatpush1.bf16.msra.mxu0 0
  %1511 = vmatprep.subr.bf16.mxu0 0
  %1512 = vmatpush1.bf16.msra.mxu0 0
  %1513 = vmatprep.subr.bf16.mxu0 0
  %1514 = vmatpush1.bf16.msra.mxu0 0
  %1515 = vmatprep.subr.bf16.mxu0 0
  %1516 = vmatpush1.bf16.msra.mxu0 0
  %1517 = vmatprep.subr.bf16.mxu0 0
  %1518 = vmatpush1.bf16.msra.mxu0 0
  %1519 = vmatprep.subr.bf16.mxu0 0
  %1520 = vmatpush1.bf16.msra.mxu0 0
  %1521 = vmatprep.subr.bf16.mxu0 0
  %1522 = vmatpush1.bf16.msra.mxu0 0
  %1523 = vmatprep.subr.bf16.mxu0 0
  %1524 = vmatpush1.bf16.msra.mxu0 0
  %1525 = vmatprep.subr.bf16.mxu0 0
  %1526 = vmatpush1.bf16.msra.mxu0 0
  %1527 = vmatprep.subr.bf16.mxu0 0
  %1528 = vmatpush1.bf16.msra.mxu0 0
  %1529 = vmatprep.subr.bf16.mxu0 0
  %1530 = vmatpush1.bf16.msra.mxu0 0
  %1531 = vmatprep.subr.bf16.mxu0 0
  %1532 = vmatpush1.bf16.msra.mxu0 0
  %1533 = vmatprep.subr.bf16.mxu0 0
  %1534 = vmatpush1.bf16.msra.mxu0 0
  %1535 = vmatprep.subr.bf16.mxu0 0
  %1536 = vmatpush1.bf16.msra.mxu0 0
  %1537 = vmatprep.mubr.bf16.mxu0 0
  %1538 = vmatmul.mubr.bf16.gmra.mrb[0].mxu0 %v1503
  %v1539 = vpop.f32.mrb[0].mxu0
  %v1540 = vadd.f32 %v1489, %v1539
  %v1541 = vpop.f32.mrb[0].mxu0
  %v1542 = vpop.f32.mrb[0].mxu0
  %v1543 = vadd.f32 %v1489, %v1542
  %v1544 = vpop.f32.mrb[0].mxu0
  %1545 = vdwg.mxu0
  %v1546 = vadd.f32 %v948, %v1540
  %v1547 = vadd.f32 %v949, %v1543
  %v1548 = vsel %vm53, %v1546, 0.0
  %1549 = vadd.xlane.f32.xlu0 %v1548
  %v1550 = vpop.xlane.xlu0 %1549
  %v1551 = vsel %vm53, %v1547, 0.0
  %1552 = vadd.xlane.f32.xlu0 %v1551
  %v1553 = vpop.xlane.xlu0 %1552
  %v1554 = vmul.f32 %v1550, %v60
  %v1555 = vmul.f32 %v1553, %v60
  %v1556 = vsub.f32 %v1546, %v1554
  %v1557 = vsub.f32 %v1547, %v1555
  %v1558 = vmul.f32 %v1556, %v1556
  %v1559 = vmul.f32 %v1557, %v1557
  %v1560 = vsel %vm53, %v1558, 0.0
  %1561 = vadd.xlane.f32.xlu0 %v1560
  %v1562 = vpop.xlane.xlu0 %1561
  %v1563 = vsel %vm53, %v1559, 0.0
  %1564 = vadd.xlane.f32.xlu0 %v1563
  %v1565 = vpop.xlane.xlu0 %1564
  %v1566 = vmul.f32 %v1562, %v60
  %v1567 = vmul.f32 %v1565, %v60
  %v1568 = vadd.f32 %v1566, 1e-12
  %v1569 = vadd.f32 %v1567, 1e-12
  %v1570 = vrsqrt.pop %v1568
  %v1571 = vrsqrt.pop %v1569
  %v1572 = vmul.f32 %v1556, %v1570
  %v1573 = vmul.f32 %v1557, %v1571
  %v1574 = vlaneseq
  %v1575 = vshrl.u32 %v1574, 7
  %v1576 = vsub.s32 1, %v1575
  %v1577 = vrot.slane %v1479, %v1576
  %v1578 = vmul.f32 %v1572, %v1577
  %v1579 = vmul.f32 %v1573, %v1577
  %v1580 = vlaneseq
  %v1581 = vshrl.u32 %v1580, 7
  %v1582 = vsub.s32 2, %v1581
  %v1583 = vrot.slane %v1479, %v1582
  %v1584 = vadd.f32 %v1578, %v1583
  %v1585 = vadd.f32 %v1579, %v1583
  %s1586 = scalar_lea.vmem %s6, 16
  %v1587 = vld [vmem:[%s1586] sm:$0xf]
  %v1588 = vld [vmem:[%s1586 + $0x4] sm:$0xf]
  %v1589 = vld [vmem:[%s1586 + $0x8] sm:$0xf]
  %v1590 = vld [vmem:[%s1586 + $0xc] sm:$0xf]
  %v1591 = vpack.c.bf16 %v1585, %v1584
  %s1592 = scalar_lea.vmem %s7, 1
  %v1593 = vld [vmem:[%s1592] sm:$0x1]
  %v1595 = vlaneseq
  %v1596 = vshrl.u32 %v1595, 7
  %v1597 = vsub.s32 0, %v1596
  %v1598 = vrot.slane %v1593, %v1597
  %v1604 = vunpack.c.l.b16 %v1587
  %v1605 = vunpack.c.l.b16 %v1588
  %v1606 = vunpack.c.l.b16 %v1589
  %v1607 = vunpack.c.l.b16 %v1590
  %v1608 = vpack.c.b16 %v1605, %v1604
  %v1609 = vpack.c.b16 %v1607, %v1606
  %v1613 = vsel %vm53, %v1591, 0
  %1615 = vmatprep.subr.bf16.mxu0 0
  %1616 = vmatpush1.bf16.msra.mxu0 %v1608
  %1617 = vmatprep.subr.bf16.mxu0 0
  %1618 = vmatpush1.bf16.msra.mxu0 %v1609
  %1619 = vmatprep.subr.bf16.mxu0 0
  %1620 = vmatpush1.bf16.msra.mxu0 0
  %1621 = vmatprep.subr.bf16.mxu0 0
  %1622 = vmatpush1.bf16.msra.mxu0 0
  %1623 = vmatprep.subr.bf16.mxu0 0
  %1624 = vmatpush1.bf16.msra.mxu0 0
  %1625 = vmatprep.subr.bf16.mxu0 0
  %1626 = vmatpush1.bf16.msra.mxu0 0
  %1627 = vmatprep.subr.bf16.mxu0 0
  %1628 = vmatpush1.bf16.msra.mxu0 0
  %1629 = vmatprep.subr.bf16.mxu0 0
  %1630 = vmatpush1.bf16.msra.mxu0 0
  %1631 = vmatprep.subr.bf16.mxu0 0
  %1632 = vmatpush1.bf16.msra.mxu0 0
  %1633 = vmatprep.subr.bf16.mxu0 0
  %1634 = vmatpush1.bf16.msra.mxu0 0
  %1635 = vmatprep.subr.bf16.mxu0 0
  %1636 = vmatpush1.bf16.msra.mxu0 0
  %1637 = vmatprep.subr.bf16.mxu0 0
  %1638 = vmatpush1.bf16.msra.mxu0 0
  %1639 = vmatprep.subr.bf16.mxu0 0
  %1640 = vmatpush1.bf16.msra.mxu0 0
  %1641 = vmatprep.subr.bf16.mxu0 0
  %1642 = vmatpush1.bf16.msra.mxu0 0
  %1643 = vmatprep.subr.bf16.mxu0 0
  %1644 = vmatpush1.bf16.msra.mxu0 0
  %1645 = vmatprep.subr.bf16.mxu0 0
  %1646 = vmatpush1.bf16.msra.mxu0 0
  %1647 = vmatprep.mubr.bf16.mxu0 0
  %1648 = vmatmul.mubr.bf16.gmra.mrb[0].mxu0 %v1613
  %v1649 = vpop.f32.mrb[0].mxu0
  %v1650 = vadd.f32 %v1598, %v1649
  %v1651 = vpop.f32.mrb[0].mxu0
  %v1652 = vpop.f32.mrb[0].mxu0
  %v1653 = vadd.f32 %v1598, %v1652
  %v1654 = vpop.f32.mrb[0].mxu0
  %1655 = vdwg.mxu0
  %v1656 = vmul.f32 %v1650, 0.5
  %v1657 = vmul.f32 %v1653, 0.5
  %v1658 = vmul.f32 %v1650, 0.044715
  %v1659 = vmul.f32 %v1653, 0.044715
  %v1660 = vmul.f32 %v1658, %v1650
  %v1661 = vmul.f32 %v1659, %v1653
  %v1662 = vmul.f32 %v1660, %v1650
  %v1663 = vmul.f32 %v1661, %v1653
  %v1664 = vadd.f32 %v1650, %v1662
  %v1665 = vadd.f32 %v1653, %v1663
  %v1666 = vmul.f32 %v1664, 0.7978846
  %v1667 = vmul.f32 %v1665, 0.7978846
  %v1668 = vtanh.pop %v1666
  %v1669 = vtanh.pop %v1667
  %v1670 = vadd.f32 %v1668, 1.0
  %v1671 = vadd.f32 %v1669, 1.0
  %v1672 = vmul.f32 %v1656, %v1670
  %v1673 = vmul.f32 %v1657, %v1671
  %s1674 = scalar_lea.vmem %s8, 32
  %v1675 = vld [vmem:[%s1674] sm:$0xf]
  %v1676 = vld [vmem:[%s1674 + $0x4] sm:$0xf]
  %v1677 = vld [vmem:[%s1674 + $0x8] sm:$0xf]
  %v1678 = vld [vmem:[%s1674 + $0xc] sm:$0xf]
  %v1679 = vld [vmem:[%s1674 + $0x10] sm:$0xf]
  %v1680 = vld [vmem:[%s1674 + $0x14] sm:$0xf]
  %v1681 = vld [vmem:[%s1674 + $0x18] sm:$0xf]
  %v1682 = vld [vmem:[%s1674 + $0x1c] sm:$0xf]
  %v1683 = vpack.c.bf16 %v1673, %v1672
  %v1684 = vlaneseq
  %v1685 = vshrl.u32 %v1684, 7
  %v1686 = vsub.s32 3, %v1685
  %v1687 = vrot.slane %v1479, %v1686
  %v1696 = vunpack.c.l.b16 %v1675
  %v1697 = vunpack.c.l.b16 %v1676
  %v1698 = vunpack.c.l.b16 %v1677
  %v1699 = vunpack.c.l.b16 %v1678
  %v1700 = vunpack.c.l.b16 %v1679
  %v1701 = vunpack.c.l.b16 %v1680
  %v1702 = vunpack.c.l.b16 %v1681
  %v1703 = vunpack.c.l.b16 %v1682
  %v1704 = vpack.c.b16 %v1697, %v1696
  %v1705 = vpack.c.b16 %v1699, %v1698
  %v1706 = vpack.c.b16 %v1701, %v1700
  %v1707 = vpack.c.b16 %v1703, %v1702
  %v1713 = vsel %vm865, %v1683, 0
  %1715 = vmatprep.subr.bf16.mxu0 0
  %1716 = vmatpush1.bf16.msra.mxu0 %v1704
  %1717 = vmatprep.subr.bf16.mxu0 0
  %1718 = vmatpush1.bf16.msra.mxu0 %v1705
  %1719 = vmatprep.subr.bf16.mxu0 0
  %1720 = vmatpush1.bf16.msra.mxu0 %v1706
  %1721 = vmatprep.subr.bf16.mxu0 0
  %1722 = vmatpush1.bf16.msra.mxu0 %v1707
  %1723 = vmatprep.subr.bf16.mxu0 0
  %1724 = vmatpush1.bf16.msra.mxu0 0
  %1725 = vmatprep.subr.bf16.mxu0 0
  %1726 = vmatpush1.bf16.msra.mxu0 0
  %1727 = vmatprep.subr.bf16.mxu0 0
  %1728 = vmatpush1.bf16.msra.mxu0 0
  %1729 = vmatprep.subr.bf16.mxu0 0
  %1730 = vmatpush1.bf16.msra.mxu0 0
  %1731 = vmatprep.subr.bf16.mxu0 0
  %1732 = vmatpush1.bf16.msra.mxu0 0
  %1733 = vmatprep.subr.bf16.mxu0 0
  %1734 = vmatpush1.bf16.msra.mxu0 0
  %1735 = vmatprep.subr.bf16.mxu0 0
  %1736 = vmatpush1.bf16.msra.mxu0 0
  %1737 = vmatprep.subr.bf16.mxu0 0
  %1738 = vmatpush1.bf16.msra.mxu0 0
  %1739 = vmatprep.subr.bf16.mxu0 0
  %1740 = vmatpush1.bf16.msra.mxu0 0
  %1741 = vmatprep.subr.bf16.mxu0 0
  %1742 = vmatpush1.bf16.msra.mxu0 0
  %1743 = vmatprep.subr.bf16.mxu0 0
  %1744 = vmatpush1.bf16.msra.mxu0 0
  %1745 = vmatprep.subr.bf16.mxu0 0
  %1746 = vmatpush1.bf16.msra.mxu0 0
  %1747 = vmatprep.mubr.bf16.mxu0 0
  %1748 = vmatmul.mubr.bf16.gmra.mrb[0].mxu0 %v1713
  %v1749 = vpop.f32.mrb[0].mxu0
  %v1750 = vadd.f32 %v1687, %v1749
  %v1751 = vpop.f32.mrb[0].mxu0
  %v1752 = vpop.f32.mrb[0].mxu0
  %v1753 = vadd.f32 %v1687, %v1752
  %v1754 = vpop.f32.mrb[0].mxu0
  %1755 = vdwg.mxu0
  %v1756 = vadd.f32 %v1584, %v1750
  %v1757 = vadd.f32 %v1585, %v1753
  %v1758 = vsel %vm53, %v1756, 0.0
  %1759 = vadd.xlane.f32.xlu0 %v1758
  %v1760 = vpop.xlane.xlu0 %1759
  %v1761 = vsel %vm53, %v1757, 0.0
  %1762 = vadd.xlane.f32.xlu0 %v1761
  %v1763 = vpop.xlane.xlu0 %1762
  %v1764 = vmul.f32 %v1760, %v60
  %v1765 = vmul.f32 %v1763, %v60
  %v1766 = vsub.f32 %v1756, %v1764
  %v1767 = vsub.f32 %v1757, %v1765
  %v1768 = vmul.f32 %v1766, %v1766
  %v1769 = vmul.f32 %v1767, %v1767
  %v1770 = vsel %vm53, %v1768, 0.0
  %1771 = vadd.xlane.f32.xlu0 %v1770
  %v1772 = vpop.xlane.xlu0 %1771
  %v1773 = vsel %vm53, %v1769, 0.0
  %1774 = vadd.xlane.f32.xlu0 %v1773
  %v1775 = vpop.xlane.xlu0 %1774
  %v1776 = vmul.f32 %v1772, %v60
  %v1777 = vmul.f32 %v1775, %v60
  %v1778 = vadd.f32 %v1776, 1e-12
  %v1779 = vadd.f32 %v1777, 1e-12
  %v1780 = vrsqrt.pop %v1778
  %v1781 = vrsqrt.pop %v1779
  %v1782 = vmul.f32 %v1766, %v1780
  %v1783 = vmul.f32 %v1767, %v1781
  %v1784 = vlaneseq
  %v1785 = vshrl.u32 %v1784, 7
  %v1786 = vsub.s32 4, %v1785
  %v1787 = vrot.slane %v1479, %v1786
  %v1788 = vmul.f32 %v1782, %v1787
  %v1789 = vmul.f32 %v1783, %v1787
  %v1790 = vlaneseq
  %v1791 = vshrl.u32 %v1790, 7
  %v1792 = vsub.s32 5, %v1791
  %v1793 = vrot.slane %v1479, %v1792
  %v1794 = vadd.f32 %v1788, %v1793
  %v1795 = vadd.f32 %v1789, %v1793
  %v1796 = vld [vmem:[%s10] sm:$0xf]
  %v1797 = vld [vmem:[%s10 + $0x4] sm:$0xf]
  %v1798 = vld [vmem:[%s10 + $0x8] sm:$0xf]
  %v1799 = vld [vmem:[%s10 + $0xc] sm:$0xf]
  %v1800 = vpack.c.bf16 %v1794, %v1794
  %v1801 = vpack.c.bf16 %v1795, %v1795
  %v1802 = vld [vmem:[%s11] sm:$0x1]
  %v1804 = vlaneseq
  %v1805 = vshrl.u32 %v1804, 7
  %v1806 = vsub.s32 0, %v1805
  %v1807 = vrot.slane %v1802, %v1806
  %v1811 = vunpack.c.l.b16 %v1800
  %v1812 = vunpack.c.l.b16 %v1801
  %v1813 = vrot.slane %v1812, 7
  %vm1814 = vcmask 1041409
  %v1815 = vsel %vm1814, %v1813, %v1811
  %v1816 = vpack.c.b16 %v1815, %v1815
  %v1821 = vunpack.c.l.b16 %v1796
  %v1822 = vunpack.c.l.b16 %v1797
  %v1823 = vunpack.c.l.b16 %v1798
  %v1824 = vunpack.c.l.b16 %v1799
  %v1825 = vpack.c.b16 %v1822, %v1821
  %v1826 = vpack.c.b16 %v1824, %v1823
  %v1830 = vsel %vm53, %v1816, 0
  %1832 = vmatprep.subr.bf16.mxu0 0
  %1833 = vmatpush1.bf16.msra.mxu0 %v1825
  %1834 = vmatprep.subr.bf16.mxu0 0
  %1835 = vmatpush1.bf16.msra.mxu0 %v1826
  %1836 = vmatprep.subr.bf16.mxu0 0
  %1837 = vmatpush1.bf16.msra.mxu0 0
  %1838 = vmatprep.subr.bf16.mxu0 0
  %1839 = vmatpush1.bf16.msra.mxu0 0
  %1840 = vmatprep.subr.bf16.mxu0 0
  %1841 = vmatpush1.bf16.msra.mxu0 0
  %1842 = vmatprep.subr.bf16.mxu0 0
  %1843 = vmatpush1.bf16.msra.mxu0 0
  %1844 = vmatprep.subr.bf16.mxu0 0
  %1845 = vmatpush1.bf16.msra.mxu0 0
  %1846 = vmatprep.subr.bf16.mxu0 0
  %1847 = vmatpush1.bf16.msra.mxu0 0
  %1848 = vmatprep.subr.bf16.mxu0 0
  %1849 = vmatpush1.bf16.msra.mxu0 0
  %1850 = vmatprep.subr.bf16.mxu0 0
  %1851 = vmatpush1.bf16.msra.mxu0 0
  %1852 = vmatprep.subr.bf16.mxu0 0
  %1853 = vmatpush1.bf16.msra.mxu0 0
  %1854 = vmatprep.subr.bf16.mxu0 0
  %1855 = vmatpush1.bf16.msra.mxu0 0
  %1856 = vmatprep.subr.bf16.mxu0 0
  %1857 = vmatpush1.bf16.msra.mxu0 0
  %1858 = vmatprep.subr.bf16.mxu0 0
  %1859 = vmatpush1.bf16.msra.mxu0 0
  %1860 = vmatprep.subr.bf16.mxu0 0
  %1861 = vmatpush1.bf16.msra.mxu0 0
  %1862 = vmatprep.subr.bf16.mxu0 0
  %1863 = vmatpush1.bf16.msra.mxu0 0
  %1864 = vmatprep.mubr.bf16.mxu0 0
  %1865 = vmatmul.mubr.bf16.gmra.mrb[0].mxu0 %v1830
  %v1866 = vpop.f32.mrb[0].mxu0
  %v1867 = vadd.f32 %v1807, %v1866
  %v1868 = vpop.f32.mrb[0].mxu0
  %v1869 = vpop.f32.mrb[0].mxu0
  %v1870 = vpop.f32.mrb[0].mxu0
  %1871 = vdwg.mxu0
  %v1872 = vtanh.pop %v1867
  %v1873 = vld [vmem:[%s12] sm:$0xf]
  %v1874 = vld [vmem:[%s12 + $0x4] sm:$0xf]
  %v1875 = vld [vmem:[%s12 + $0x8] sm:$0xf]
  %v1876 = vld [vmem:[%s12 + $0xc] sm:$0xf]
  %v1877 = vpack.c.bf16 %v1872, %v1872
  %v1878 = vld [vmem:[#allocation2] sm:$0x1]
  %v1880 = vlaneseq
  %v1881 = vshrl.u32 %v1880, 7
  %v1882 = vsub.s32 0, %v1881
  %v1883 = vrot.slane %v1878, %v1882
  %v1889 = vunpack.c.l.b16 %v1873
  %v1890 = vunpack.c.l.b16 %v1874
  %v1891 = vunpack.c.l.b16 %v1875
  %v1892 = vunpack.c.l.b16 %v1876
  %v1893 = vpack.c.b16 %v1890, %v1889
  %v1894 = vpack.c.b16 %v1892, %v1891
  %v1898 = vsel %vm53, %v1877, 0
  %1900 = vmatprep.subr.bf16.mxu0 0
  %1901 = vmatpush1.bf16.msra.mxu0 %v1893
  %1902 = vmatprep.subr.bf16.mxu0 0
  %1903 = vmatpush1.bf16.msra.mxu0 %v1894
  %1904 = vmatprep.subr.bf16.mxu0 0
  %1905 = vmatpush1.bf16.msra.mxu0 0
  %1906 = vmatprep.subr.bf16.mxu0 0
  %1907 = vmatpush1.bf16.msra.mxu0 0
  %1908 = vmatprep.subr.bf16.mxu0 0
  %1909 = vmatpush1.bf16.msra.mxu0 0
  %1910 = vmatprep.subr.bf16.mxu0 0
  %1911 = vmatpush1.bf16.msra.mxu0 0
  %1912 = vmatprep.subr.bf16.mxu0 0
  %1913 = vmatpush1.bf16.msra.mxu0 0
  %1914 = vmatprep.subr.bf16.mxu0 0
  %1915 = vmatpush1.bf16.msra.mxu0 0
  %1916 = vmatprep.subr.bf16.mxu0 0
  %1917 = vmatpush1.bf16.msra.mxu0 0
  %1918 = vmatprep.subr.bf16.mxu0 0
  %1919 = vmatpush1.bf16.msra.mxu0 0
  %1920 = vmatprep.subr.bf16.mxu0 0
  %1921 = vmatpush1.bf16.msra.mxu0 0
  %1922 = vmatprep.subr.bf16.mxu0 0
  %1923 = vmatpush1.bf16.msra.mxu0 0
  %1924 = vmatprep.subr.bf16.mxu0 0
  %1925 = vmatpush1.bf16.msra.mxu0 0
  %1926 = vmatprep.subr.bf16.mxu0 0
  %1927 = vmatpush1.bf16.msra.mxu0 0
  %1928 = vmatprep.subr.bf16.mxu0 0
  %1929 = vmatpush1.bf16.msra.mxu0 0
  %1930 = vmatprep.subr.bf16.mxu0 0
  %1931 = vmatpush1.bf16.msra.mxu0 0
  %1932 = vmatprep.mubr.bf16.mxu0 0
  %1933 = vmatmul.mubr.bf16.gmra.mrb[0].mxu0 %v1898
  %v1934 = vpop.f32.mrb[0].mxu0
  %v1935 = vadd.f32 %v1883, %v1934
  %v1936 = vpop.f32.mrb[0].mxu0
  %v1937 = vpop.f32.mrb[0].mxu0
  %v1938 = vpop.f32.mrb[0].mxu0
  %1939 = vdwg.mxu0
  %vm1940 = vcmask 1024
  %1941 = vst.msk [vmem:[%s14] sm:$0x3] %vm1940, %v1935
  // Predicated region
  $region58: #{bert_classifier_forward.1} parent=0 // pred_check
    _
  $region59: #{bert_classifier_forward.1} parent=0 // pred_check_branch
    %1943 = sbr.rel (0) target = $region61
  $region60: #{bert_classifier_forward.1} parent=0 // pred_region
    _
  $region61: #{bert_classifier_forward.1} parent=0 // pred_fallthru
    _
  // Predicated region
  $region62: #{bert_classifier_forward.1} parent=0 // pred_check
    _
  $region63: #{bert_classifier_forward.1} parent=0 // pred_check_branch
    %1945 = sbr.rel (0) target = $region65
  $region64: #{bert_classifier_forward.1} parent=0 // pred_region
    _
  $region65: #{bert_classifier_forward.1} parent=0 // pred_fallthru
    _

</llo_original>
